<compile_context>
chip_gen: v6e
topology: v6e:2x2x1
jax: 0.10.0
libtpu: 0.0.40
codegen_flags: <defaults>
</compile_context>

<pallas_src>
import jax
import jax.numpy as jnp
from jax import lax
from jax.experimental import pallas as pl
from jax.experimental.pallas import tpu as pltpu

KSIZE = 3  # all conv layers: kernel_size=3, stride=1, no padding ("valid")


def cnn_kernel(x_ref, w1_ref, b1_ref, w2_ref, b2_ref, w3_ref, b3_ref,
               wf_ref, bf_ref, out_ref):
    h = x_ref[...]                                  # (B_TILE, L, Cin), compute dtype

    def conv_relu(h, w_ref, b_ref):
        # h: (B, Lin, Cin); w_ref: (K, Cin, Cout) compute dtype; b_ref: (1, Cout) f32
        lout = h.shape[1] - (KSIZE - 1)
        acc = None
        for k in range(KSIZE):                      # static 3-tap unroll
            tap = h[:, k:k + lout, :]               # (B, Lout, Cin) static slice
            part = lax.dot_general(                 # no reshape across (8,128) tiles
                tap, w_ref[k],
                dimension_numbers=(((2,), (0,)), ((), ())),
                preferred_element_type=jnp.float32)  # (B, Lout, Cout) f32
            acc = part if acc is None else acc + part
        acc = acc + b_ref[...]                      # f32 bias
        return jnp.maximum(acc, 0.0).astype(h.dtype)

    h1 = conv_relu(h,  w1_ref, b1_ref)              # (B, L-2, 32)
    h2 = conv_relu(h1, w2_ref, b2_ref)              # (B, L-4, 64)
    h3 = conv_relu(h2, w3_ref, b3_ref)              # (B, L-6, 32)

    # AdaptiveAvgPool1d(1): f32 sum over length, scale by a compile-time 1/L.
    l3 = h3.shape[1]
    pooled = (jnp.sum(h3.astype(jnp.float32), axis=1)
              * jnp.float32(1.0 / l3)).astype(h3.dtype)      # (B, 32)

    # fc: (B, 32) @ (32, NC_pad) + f32 bias -> lane-dense (B, NC_pad) store.
    logits = jnp.dot(pooled, wf_ref[...], preferred_element_type=jnp.float32)
    out_ref[...] = (logits + bf_ref[...]).astype(out_ref.dtype)


def _round_up(x, m):
    return ((x + m - 1) // m) * m


def _cdiv(a, b):
    return -(-a // b)


# Per-generation per-step VMEM budget and matching scoped-VMEM limit.
_BUDGET_BYTES = {"v5e": 48 << 20, "v6e": 56 << 20, "v7x": 24 << 20}
_VMEM_LIMIT_BYTES = {"v5e": 100 << 20, "v6e": 100 << 20, "v7x": 48 << 20}


def tpu_generation():
    try:
        kind = jax.devices()[0].device_kind.lower()
    except Exception:
        return "unknown"
    if "v5" in kind and ("lite" in kind or "5e" in kind):
        return "v5e"
    if "v6" in kind:
        return "v6e"
    if "v7" in kind or "7x" in kind:
        return "v7x"
    return "unknown"


def _per_row_vmem_bytes(l, compute_dtype):
    """(8,128)-padding-aware VMEM bytes per batch row."""
    itemsize = jnp.dtype(compute_dtype).itemsize
    sub = 8 * (4 // itemsize)          # sublane granule: 8 rows f32, 16 rows bf16
    lane = 128                         # every C in {4,32,64} pads to a full lane reg

    def act(length):                   # activation buffer in compute dtype
        return _round_up(max(length, 1), sub) * lane * itemsize

    def f32buf(length):                # f32 accumulator / temp
        return _round_up(max(length, 1), 8) * lane * 4

    return (2 * act(l)                                 # double-buffered input block
            + act(l - 2) + act(l - 4) + act(l - 6)     # h1, h2, h3
            + f32buf(l - 2)                            # largest live f32 conv acc
            + 2 * lane * 4)                            # pooled / logits rows


def pick_tiling(n, l, compute_dtype, generation):
    """Return (b_tile, num_grid_steps)."""
    budget = _BUDGET_BYTES.get(generation, 24 << 20)
    per_row = _per_row_vmem_bytes(l, compute_dtype)
    bt = int(budget // max(per_row, 1))
    bt -= bt % 8
    bt = max(8, min(bt, 1024))
    if n <= bt:
        return n, 1                     # single step covers the whole batch
    steps = _cdiv(n, bt)
    if generation == "v7x" and steps % 2:
        steps += 1                      # even step count -> both v7x TCs balanced
    bt = _round_up(_cdiv(n, steps), 8)  # never exceeds the budget-derived bt
    return bt, steps


def cnn_forward(x_nlc, params, *, compute_dtype=None, b_tile=None):
    """x_nlc: (N, L, Cin) channels-last float32. Returns (N, num_classes) f32."""
    w1, b1, w2, b2, w3, b3, wf, bf = params
    N, L, Cin = x_nlc.shape
    NC = wf.shape[1]
    assert L >= 3 * (KSIZE - 1) + 1, "need L >= 7 for three VALID kernel_size=3 convs"

    gen = tpu_generation()
    if compute_dtype is None:
        # bf16 MXU/VPU native on v6e/v7x; v5e has no bf16 VPU/EUP datapath.
        compute_dtype = jnp.bfloat16 if gen in ("v6e", "v7x") else jnp.float32

    if b_tile is None:
        b_tile, steps = pick_tiling(N, L, compute_dtype, gen)
    else:
        steps = _cdiv(N, b_tile)

    # Pad the batch so the tile divides it evenly (padded rows dropped below).
    Np = b_tile * steps
    if Np != N:
        x_nlc = jnp.pad(x_nlc, ((0, Np - N), (0, 0), (0, 0)))

    # Pad num_classes to a full 128-lane register -> unmasked lane-dense vst.
    NCp = _round_up(NC, 128)
    if NCp != NC:
        wf = jnp.pad(wf, ((0, 0), (0, NCp - NC)))
        bf = jnp.pad(bf, ((0, 0), (0, NCp - NC)))

    # One-time param/input prep in XLA (nothing re-done per grid step):
    # MXU operands in compute dtype, biases in f32.
    x_nlc = x_nlc.astype(compute_dtype)
    w1c, w2c, w3c, wfc = (w.astype(compute_dtype) for w in (w1, w2, w3, wf))
    b1f, b2f, b3f, bff = (b.astype(jnp.float32) for b in (b1, b2, b3, bf))

    # Weights/biases: full-array constant blocks -> stay resident in VMEM.
    const_spec = lambda a: pl.BlockSpec(a.shape, lambda i, nd=a.ndim: (0,) * nd)

    out = pl.pallas_call(
        cnn_kernel,
        out_shape=jax.ShapeDtypeStruct((Np, NCp), jnp.float32),
        grid_spec=pltpu.PrefetchScalarGridSpec(
            num_scalar_prefetch=0,
            grid=(steps,),
            in_specs=[
                pl.BlockSpec((b_tile, L, Cin), lambda i: (i, 0, 0)),
                const_spec(w1c), const_spec(b1f),
                const_spec(w2c), const_spec(b2f),
                const_spec(w3c), const_spec(b3f),
                const_spec(wfc), const_spec(bff),
            ],
            out_specs=pl.BlockSpec((b_tile, NCp), lambda i: (i, 0)),
        ),
        compiler_params=pltpu.CompilerParams(
            dimension_semantics=("parallel",),
            vmem_limit_bytes=_VMEM_LIMIT_BYTES.get(gen, 48 << 20)),
    )(x_nlc, w1c, b1f, w2c, b2f, w3c, b3f, wfc, bff)

    return out[:N, :NC]


def ref_forward(x_ncl, params):
    """Pure-JAX reference mirroring the PyTorch forward (NCL layout)."""
    w1, b1, w2, b2, w3, b3, wf, bf = params

    def conv1d_relu(x, w_kio, b_1o):
        w_oik = jnp.transpose(w_kio, (2, 1, 0))      # torch layout (Cout, Cin, K)
        y = jax.lax.conv_general_dilated(
            x, w_oik, window_strides=(1,), padding="VALID",
            dimension_numbers=("NCH", "OIH", "NCH"))
        return jax.nn.relu(y + b_1o[0][None, :, None])

    h = conv1d_relu(x_ncl, w1, b1)
    h = conv1d_relu(h, w2, b2)
    h = conv1d_relu(h, w3, b3)
    pooled = jnp.mean(h, axis=-1)                    # (N, 32)
    return pooled @ wf + bf[0]


def init_params(key, channels, num_classes):
    ks = jax.random.split(key, 8)

    def u(k, shape, fan_in):
        bound = 1.0 / jnp.sqrt(fan_in)
        return jax.random.uniform(k, shape, jnp.float32, -bound, bound)

    w1 = u(ks[0], (KSIZE, channels, 32), channels * KSIZE)
    b1 = u(ks[1], (1, 32), channels * KSIZE)
    w2 = u(ks[2], (KSIZE, 32, 64), 32 * KSIZE)
    b2 = u(ks[3], (1, 64), 32 * KSIZE)
    w3 = u(ks[4], (KSIZE, 64, 32), 64 * KSIZE)
    b3 = u(ks[5], (1, 32), 64 * KSIZE)
    wf = u(ks[6], (32, num_classes), 32)
    bf = u(ks[7], (1, num_classes), 32)
    return (w1, b1, w2, b2, w3, b3, wf, bf)


if __name__ == "__main__":
    key = jax.random.PRNGKey(0)
    k_in, k_p = jax.random.split(key)

    batch, channels, seq_len, num_classes = 2, 4, 16, 10
    x_ncl = jax.random.normal(k_in, (batch, channels, seq_len), jnp.float32)
    params = init_params(k_p, channels, num_classes)

    x_nlc = jnp.transpose(x_ncl, (0, 2, 1))           # NCL -> NLC for the kernel
    ref = ref_forward(x_ncl, params)

    # f32 MXU path: matches the reference (up to accumulation order).
    out = jax.block_until_ready(cnn_forward(x_nlc, params, compute_dtype=jnp.float32))
    assert out.shape == (batch, num_classes)
    assert jnp.allclose(out, ref, atol=1e-4, rtol=1e-4), (out, ref)

    # Generation-default path (bf16 operands on v6e/v7x, f32 on v5e): loose tol.
    out_auto = jax.block_until_ready(cnn_forward(x_nlc, params))
    assert out_auto.shape == (batch, num_classes)
    assert jnp.allclose(out_auto, ref, atol=5e-2, rtol=5e-2), (out_auto, ref)

    # Explicit bf16-operand path (f32 accumulate) -- loose tolerance.
    out_bf16 = jax.block_until_ready(
        cnn_forward(x_nlc, params, compute_dtype=jnp.bfloat16))
    assert jnp.allclose(out_bf16, ref, atol=5e-2, rtol=5e-2), (out_bf16, ref)

    # Multi-step grid path (batch padding + >1 grid steps), f32 exact.
    big_batch = 20
    xb_ncl = jax.random.normal(jax.random.PRNGKey(1),
                               (big_batch, channels, seq_len), jnp.float32)
    refb = ref_forward(xb_ncl, params)
    outb = jax.block_until_ready(
        cnn_forward(jnp.transpose(xb_ncl, (0, 2, 1)), params,
                    compute_dtype=jnp.float32, b_tile=8))
    assert outb.shape == (big_batch, num_classes)
    assert jnp.allclose(outb, refb, atol=1e-4, rtol=1e-4), (outb, refb)

    print("KERNEL_OK")
</pallas_src>

<mosaic_0001>
module attributes {stable_mosaic.version = 11 : i64} {
  func.func @cnn_kernel(%arg0: i32, %arg1: memref<2x16x4xf32, #tpu.memory_space<vmem>>, %arg2: memref<3x4x32xf32, #tpu.memory_space<vmem>>, %arg3: memref<1x32xf32, #tpu.memory_space<vmem>>, %arg4: memref<3x32x64xf32, #tpu.memory_space<vmem>>, %arg5: memref<1x64xf32, #tpu.memory_space<vmem>>, %arg6: memref<3x64x32xf32, #tpu.memory_space<vmem>>, %arg7: memref<1x32xf32, #tpu.memory_space<vmem>>, %arg8: memref<32x128xf32, #tpu.memory_space<vmem>>, %arg9: memref<1x128xf32, #tpu.memory_space<vmem>>, %arg10: memref<2x128xf32, #tpu.memory_space<vmem>>) attributes {dimension_semantics = [#tpu.dimension_semantics<parallel>], iteration_bounds = array<i64: 1>, scalar_prefetch = 0 : i64, scratch_operands = 0 : i64, tpu.core_type = #tpu.core_type<tc>, window_params = [{transform_indices = @transform_0, window_bounds = array<i64: 2, 16, 4>}, {pipeline_mode = #tpu.pipeline_mode<synchronous>, transform_indices = @transform_1, window_bounds = array<i64: 3, 4, 32>}, {pipeline_mode = #tpu.pipeline_mode<synchronous>, transform_indices = @transform_2, window_bounds = array<i64: 1, 32>}, {pipeline_mode = #tpu.pipeline_mode<synchronous>, transform_indices = @transform_3, window_bounds = array<i64: 3, 32, 64>}, {pipeline_mode = #tpu.pipeline_mode<synchronous>, transform_indices = @transform_4, window_bounds = array<i64: 1, 64>}, {pipeline_mode = #tpu.pipeline_mode<synchronous>, transform_indices = @transform_5, window_bounds = array<i64: 3, 64, 32>}, {pipeline_mode = #tpu.pipeline_mode<synchronous>, transform_indices = @transform_6, window_bounds = array<i64: 1, 32>}, {pipeline_mode = #tpu.pipeline_mode<synchronous>, transform_indices = @transform_7, window_bounds = array<i64: 32, 128>}, {pipeline_mode = #tpu.pipeline_mode<synchronous>, transform_indices = @transform_8, window_bounds = array<i64: 1, 128>}, {transform_indices = @transform_9, window_bounds = array<i64: 2, 128>}]} {
    %c0 = arith.constant 0 : index
    %c0_0 = arith.constant 0 : index
    %c0_1 = arith.constant 0 : index
    %0 = vector.load %arg1[%c0, %c0_0, %c0_1] : memref<2x16x4xf32, #tpu.memory_space<vmem>>, vector<2x16x4xf32>
    %1 = vector.extract_strided_slice %0 {offsets = [0, 0, 0], sizes = [2, 14, 4], strides = [1, 1, 1]} : vector<2x16x4xf32> to vector<2x14x4xf32>
    %c0_2 = arith.constant 0 : index
    %c0_3 = arith.constant 0 : index
    %c0_4 = arith.constant 0 : index
    %2 = vector.load %arg2[%c0_2, %c0_3, %c0_4] : memref<3x4x32xf32, #tpu.memory_space<vmem>>, vector<1x4x32xf32>
    %3 = vector.shape_cast %2 : vector<1x4x32xf32> to vector<4x32xf32>
    %cst = arith.constant dense<0.000000e+00> : vector<2x14x32xf32>
    %4 = tpu.matmul %1, %3, %cst {dimension_numbers = #tpu.dot_dimension_numbers<[2], [0], [0, 1], [1], [0, 0, 0, 1, 1, 1], [], []>} : vector<2x14x4xf32>, vector<4x32xf32>, vector<2x14x32xf32> -> vector<2x14x32xf32>
    %5 = vector.extract_strided_slice %0 {offsets = [0, 1, 0], sizes = [2, 14, 4], strides = [1, 1, 1]} : vector<2x16x4xf32> to vector<2x14x4xf32>
    %c1 = arith.constant 1 : index
    %c0_5 = arith.constant 0 : index
    %c0_6 = arith.constant 0 : index
    %6 = vector.load %arg2[%c1, %c0_5, %c0_6] : memref<3x4x32xf32, #tpu.memory_space<vmem>>, vector<1x4x32xf32>
    %7 = vector.shape_cast %6 : vector<1x4x32xf32> to vector<4x32xf32>
    %cst_7 = arith.constant dense<0.000000e+00> : vector<2x14x32xf32>
    %8 = tpu.matmul %5, %7, %cst_7 {dimension_numbers = #tpu.dot_dimension_numbers<[2], [0], [0, 1], [1], [0, 0, 0, 1, 1, 1], [], []>} : vector<2x14x4xf32>, vector<4x32xf32>, vector<2x14x32xf32> -> vector<2x14x32xf32>
    %9 = arith.addf %4, %8 : vector<2x14x32xf32>
    %10 = vector.extract_strided_slice %0 {offsets = [0, 2, 0], sizes = [2, 14, 4], strides = [1, 1, 1]} : vector<2x16x4xf32> to vector<2x14x4xf32>
    %c2 = arith.constant 2 : index
    %c0_8 = arith.constant 0 : index
    %c0_9 = arith.constant 0 : index
    %11 = vector.load %arg2[%c2, %c0_8, %c0_9] : memref<3x4x32xf32, #tpu.memory_space<vmem>>, vector<1x4x32xf32>
    %12 = vector.shape_cast %11 : vector<1x4x32xf32> to vector<4x32xf32>
    %cst_10 = arith.constant dense<0.000000e+00> : vector<2x14x32xf32>
    %13 = tpu.matmul %10, %12, %cst_10 {dimension_numbers = #tpu.dot_dimension_numbers<[2], [0], [0, 1], [1], [0, 0, 0, 1, 1, 1], [], []>} : vector<2x14x4xf32>, vector<4x32xf32>, vector<2x14x32xf32> -> vector<2x14x32xf32>
    %14 = arith.addf %9, %13 : vector<2x14x32xf32>
    %c0_11 = arith.constant 0 : index
    %c0_12 = arith.constant 0 : index
    %15 = vector.load %arg3[%c0_11, %c0_12] : memref<1x32xf32, #tpu.memory_space<vmem>>, vector<1x32xf32>
    %16 = vector.shape_cast %15 : vector<1x32xf32> to vector<1x1x32xf32>
    %17 = vector.broadcast %16 : vector<1x1x32xf32> to vector<2x14x32xf32>
    %18 = arith.addf %14, %17 : vector<2x14x32xf32>
    %cst_13 = arith.constant 0.000000e+00 : f32
    %19 = vector.broadcast %cst_13 : f32 to vector<2x14x32xf32>
    %20 = arith.maximumf %18, %19 : vector<2x14x32xf32>
    %21 = vector.extract_strided_slice %20 {offsets = [0, 0, 0], sizes = [2, 12, 32], strides = [1, 1, 1]} : vector<2x14x32xf32> to vector<2x12x32xf32>
    %c0_14 = arith.constant 0 : index
    %c0_15 = arith.constant 0 : index
    %c0_16 = arith.constant 0 : index
    %22 = vector.load %arg4[%c0_14, %c0_15, %c0_16] : memref<3x32x64xf32, #tpu.memory_space<vmem>>, vector<1x32x64xf32>
    %23 = vector.shape_cast %22 : vector<1x32x64xf32> to vector<32x64xf32>
    %cst_17 = arith.constant dense<0.000000e+00> : vector<2x12x64xf32>
    %24 = tpu.matmul %21, %23, %cst_17 {dimension_numbers = #tpu.dot_dimension_numbers<[2], [0], [0, 1], [1], [0, 0, 0, 1, 1, 1], [], []>} : vector<2x12x32xf32>, vector<32x64xf32>, vector<2x12x64xf32> -> vector<2x12x64xf32>
    %25 = vector.extract_strided_slice %20 {offsets = [0, 1, 0], sizes = [2, 12, 32], strides = [1, 1, 1]} : vector<2x14x32xf32> to vector<2x12x32xf32>
    %c1_18 = arith.constant 1 : index
    %c0_19 = arith.constant 0 : index
    %c0_20 = arith.constant 0 : index
    %26 = vector.load %arg4[%c1_18, %c0_19, %c0_20] : memref<3x32x64xf32, #tpu.memory_space<vmem>>, vector<1x32x64xf32>
    %27 = vector.shape_cast %26 : vector<1x32x64xf32> to vector<32x64xf32>
    %cst_21 = arith.constant dense<0.000000e+00> : vector<2x12x64xf32>
    %28 = tpu.matmul %25, %27, %cst_21 {dimension_numbers = #tpu.dot_dimension_numbers<[2], [0], [0, 1], [1], [0, 0, 0, 1, 1, 1], [], []>} : vector<2x12x32xf32>, vector<32x64xf32>, vector<2x12x64xf32> -> vector<2x12x64xf32>
    %29 = arith.addf %24, %28 : vector<2x12x64xf32>
    %30 = vector.extract_strided_slice %20 {offsets = [0, 2, 0], sizes = [2, 12, 32], strides = [1, 1, 1]} : vector<2x14x32xf32> to vector<2x12x32xf32>
    %c2_22 = arith.constant 2 : index
    %c0_23 = arith.constant 0 : index
    %c0_24 = arith.constant 0 : index
    %31 = vector.load %arg4[%c2_22, %c0_23, %c0_24] : memref<3x32x64xf32, #tpu.memory_space<vmem>>, vector<1x32x64xf32>
    %32 = vector.shape_cast %31 : vector<1x32x64xf32> to vector<32x64xf32>
    %cst_25 = arith.constant dense<0.000000e+00> : vector<2x12x64xf32>
    %33 = tpu.matmul %30, %32, %cst_25 {dimension_numbers = #tpu.dot_dimension_numbers<[2], [0], [0, 1], [1], [0, 0, 0, 1, 1, 1], [], []>} : vector<2x12x32xf32>, vector<32x64xf32>, vector<2x12x64xf32> -> vector<2x12x64xf32>
    %34 = arith.addf %29, %33 : vector<2x12x64xf32>
    %c0_26 = arith.constant 0 : index
    %c0_27 = arith.constant 0 : index
    %35 = vector.load %arg5[%c0_26, %c0_27] : memref<1x64xf32, #tpu.memory_space<vmem>>, vector<1x64xf32>
    %36 = vector.shape_cast %35 : vector<1x64xf32> to vector<1x1x64xf32>
    %37 = vector.broadcast %36 : vector<1x1x64xf32> to vector<2x12x64xf32>
    %38 = arith.addf %34, %37 : vector<2x12x64xf32>
    %cst_28 = arith.constant 0.000000e+00 : f32
    %39 = vector.broadcast %cst_28 : f32 to vector<2x12x64xf32>
    %40 = arith.maximumf %38, %39 : vector<2x12x64xf32>
    %41 = vector.extract_strided_slice %40 {offsets = [0, 0, 0], sizes = [2, 10, 64], strides = [1, 1, 1]} : vector<2x12x64xf32> to vector<2x10x64xf32>
    %c0_29 = arith.constant 0 : index
    %c0_30 = arith.constant 0 : index
    %c0_31 = arith.constant 0 : index
    %42 = vector.load %arg6[%c0_29, %c0_30, %c0_31] : memref<3x64x32xf32, #tpu.memory_space<vmem>>, vector<1x64x32xf32>
    %43 = vector.shape_cast %42 : vector<1x64x32xf32> to vector<64x32xf32>
    %cst_32 = arith.constant dense<0.000000e+00> : vector<2x10x32xf32>
    %44 = tpu.matmul %41, %43, %cst_32 {dimension_numbers = #tpu.dot_dimension_numbers<[2], [0], [0, 1], [1], [0, 0, 0, 1, 1, 1], [], []>} : vector<2x10x64xf32>, vector<64x32xf32>, vector<2x10x32xf32> -> vector<2x10x32xf32>
    %45 = vector.extract_strided_slice %40 {offsets = [0, 1, 0], sizes = [2, 10, 64], strides = [1, 1, 1]} : vector<2x12x64xf32> to vector<2x10x64xf32>
    %c1_33 = arith.constant 1 : index
    %c0_34 = arith.constant 0 : index
    %c0_35 = arith.constant 0 : index
    %46 = vector.load %arg6[%c1_33, %c0_34, %c0_35] : memref<3x64x32xf32, #tpu.memory_space<vmem>>, vector<1x64x32xf32>
    %47 = vector.shape_cast %46 : vector<1x64x32xf32> to vector<64x32xf32>
    %cst_36 = arith.constant dense<0.000000e+00> : vector<2x10x32xf32>
    %48 = tpu.matmul %45, %47, %cst_36 {dimension_numbers = #tpu.dot_dimension_numbers<[2], [0], [0, 1], [1], [0, 0, 0, 1, 1, 1], [], []>} : vector<2x10x64xf32>, vector<64x32xf32>, vector<2x10x32xf32> -> vector<2x10x32xf32>
    %49 = arith.addf %44, %48 : vector<2x10x32xf32>
    %50 = vector.extract_strided_slice %40 {offsets = [0, 2, 0], sizes = [2, 10, 64], strides = [1, 1, 1]} : vector<2x12x64xf32> to vector<2x10x64xf32>
    %c2_37 = arith.constant 2 : index
    %c0_38 = arith.constant 0 : index
    %c0_39 = arith.constant 0 : index
    %51 = vector.load %arg6[%c2_37, %c0_38, %c0_39] : memref<3x64x32xf32, #tpu.memory_space<vmem>>, vector<1x64x32xf32>
    %52 = vector.shape_cast %51 : vector<1x64x32xf32> to vector<64x32xf32>
    %cst_40 = arith.constant dense<0.000000e+00> : vector<2x10x32xf32>
    %53 = tpu.matmul %50, %52, %cst_40 {dimension_numbers = #tpu.dot_dimension_numbers<[2], [0], [0, 1], [1], [0, 0, 0, 1, 1, 1], [], []>} : vector<2x10x64xf32>, vector<64x32xf32>, vector<2x10x32xf32> -> vector<2x10x32xf32>
    %54 = arith.addf %49, %53 : vector<2x10x32xf32>
    %c0_41 = arith.constant 0 : index
    %c0_42 = arith.constant 0 : index
    %55 = vector.load %arg7[%c0_41, %c0_42] : memref<1x32xf32, #tpu.memory_space<vmem>>, vector<1x32xf32>
    %56 = vector.shape_cast %55 : vector<1x32xf32> to vector<1x1x32xf32>
    %57 = vector.broadcast %56 : vector<1x1x32xf32> to vector<2x10x32xf32>
    %58 = arith.addf %54, %57 : vector<2x10x32xf32>
    %cst_43 = arith.constant 0.000000e+00 : f32
    %59 = vector.broadcast %cst_43 : f32 to vector<2x10x32xf32>
    %60 = arith.maximumf %58, %59 : vector<2x10x32xf32>
    %cst_44 = arith.constant dense<0.000000e+00> : vector<2x32xf32>
    %61 = vector.multi_reduction <add>, %60, %cst_44 [1] : vector<2x10x32xf32> to vector<2x32xf32>
    %cst_45 = arith.constant 1.000000e-01 : f32
    %62 = vector.broadcast %cst_45 : f32 to vector<2x32xf32>
    %63 = arith.mulf %61, %62 : vector<2x32xf32>
    %c0_46 = arith.constant 0 : index
    %c0_47 = arith.constant 0 : index
    %64 = vector.load %arg8[%c0_46, %c0_47] : memref<32x128xf32, #tpu.memory_space<vmem>>, vector<32x128xf32>
    %cst_48 = arith.constant dense<0.000000e+00> : vector<2x128xf32>
    %65 = tpu.matmul %63, %64, %cst_48 {dimension_numbers = #tpu.dot_dimension_numbers<[1], [0], [0], [1], [0, 0, 1, 1], [], []>} : vector<2x32xf32>, vector<32x128xf32>, vector<2x128xf32> -> vector<2x128xf32>
    %c0_49 = arith.constant 0 : index
    %c0_50 = arith.constant 0 : index
    %66 = vector.load %arg9[%c0_49, %c0_50] : memref<1x128xf32, #tpu.memory_space<vmem>>, vector<1x128xf32>
    %67 = vector.broadcast %66 : vector<1x128xf32> to vector<2x128xf32>
    %68 = arith.addf %65, %67 : vector<2x128xf32>
    %c0_51 = arith.constant 0 : index
    %c0_52 = arith.constant 0 : index
    %69 = vector.load %arg10[%c0_51, %c0_52] : memref<2x128xf32, #tpu.memory_space<vmem>>, vector<2x128xf32>
    tpu.vector_store %arg10[%c0_51, %c0_52], %68 {strides = array<i32>} : memref<2x128xf32, #tpu.memory_space<vmem>>, vector<2x128xf32>,
    return
  }
  func.func @transform_0(%arg0: i32) -> (i32, i32, i32) {
    %c0_i32 = arith.constant 0 : i32
    %c0_i32_0 = arith.constant 0 : i32
    %c0_i32_1 = arith.constant 0 : i32
    return %arg0, %c0_i32, %c0_i32_0 : i32, i32, i32
  }
  func.func @transform_1(%arg0: i32) -> (i32, i32, i32) {
    %c0_i32 = arith.constant 0 : i32
    %c0_i32_0 = arith.constant 0 : i32
    %c0_i32_1 = arith.constant 0 : i32
    %c0_i32_2 = arith.constant 0 : i32
    return %c0_i32, %c0_i32_0, %c0_i32_1 : i32, i32, i32
  }
  func.func @transform_2(%arg0: i32) -> (i32, i32) {
    %c0_i32 = arith.constant 0 : i32
    %c0_i32_0 = arith.constant 0 : i32
    %c0_i32_1 = arith.constant 0 : i32
    return %c0_i32, %c0_i32_0 : i32, i32
  }
  func.func @transform_3(%arg0: i32) -> (i32, i32, i32) {
    %c0_i32 = arith.constant 0 : i32
    %c0_i32_0 = arith.constant 0 : i32
    %c0_i32_1 = arith.constant 0 : i32
    %c0_i32_2 = arith.constant 0 : i32
    return %c0_i32, %c0_i32_0, %c0_i32_1 : i32, i32, i32
  }
  func.func @transform_4(%arg0: i32) -> (i32, i32) {
    %c0_i32 = arith.constant 0 : i32
    %c0_i32_0 = arith.constant 0 : i32
    %c0_i32_1 = arith.constant 0 : i32
    return %c0_i32, %c0_i32_0 : i32, i32
  }
  func.func @transform_5(%arg0: i32) -> (i32, i32, i32) {
    %c0_i32 = arith.constant 0 : i32
    %c0_i32_0 = arith.constant 0 : i32
    %c0_i32_1 = arith.constant 0 : i32
    %c0_i32_2 = arith.constant 0 : i32
    return %c0_i32, %c0_i32_0, %c0_i32_1 : i32, i32, i32
  }
  func.func @transform_6(%arg0: i32) -> (i32, i32) {
    %c0_i32 = arith.constant 0 : i32
    %c0_i32_0 = arith.constant 0 : i32
    %c0_i32_1 = arith.constant 0 : i32
    return %c0_i32, %c0_i32_0 : i32, i32
  }
  func.func @transform_7(%arg0: i32) -> (i32, i32) {
    %c0_i32 = arith.constant 0 : i32
    %c0_i32_0 = arith.constant 0 : i32
    %c0_i32_1 = arith.constant 0 : i32
    return %c0_i32, %c0_i32_0 : i32, i32
  }
  func.func @transform_8(%arg0: i32) -> (i32, i32) {
    %c0_i32 = arith.constant 0 : i32
    %c0_i32_0 = arith.constant 0 : i32
    %c0_i32_1 = arith.constant 0 : i32
    return %c0_i32, %c0_i32_0 : i32, i32
  }
  func.func @transform_9(%arg0: i32) -> (i32, i32) {
    %c0_i32 = arith.constant 0 : i32
    %c0_i32_0 = arith.constant 0 : i32
    return %arg0, %c0_i32 : i32, i32
  }
}

</mosaic_0001>

<llo_original>
// kernel: tpu_custom_call.1
$region0: #{tpu_custom_call.1}
  #allocation0 [shape = 'u32[]', space=smem, size = 0x4, offset = 0x4, fixed_abs, tag = 'smem constant byte address 0x4 - core index']
  #allocation1 [shape = 'u32[144,128]{1,0:T(1,128)}', space=vmem, size = 0x12000, scoped, tag = 'internal scratch']
  %s0 = inlined_call_operand.vmem [shape: f32[2,16,4], index: 0, kind: input, shape index: {}]
  %s1 = inlined_call_operand.vmem [shape: f32[3,4,32], index: 1, kind: input, shape index: {}]
  %s2 = inlined_call_operand.vmem [shape: f32[1,32], index: 2, kind: input, shape index: {}]
  %s3 = inlined_call_operand.vmem [shape: f32[3,32,64], index: 3, kind: input, shape index: {}]
  %s4 = inlined_call_operand.vmem [shape: f32[1,64], index: 4, kind: input, shape index: {}]
  %s5 = inlined_call_operand.vmem [shape: f32[3,64,32], index: 5, kind: input, shape index: {}]
  %s6 = inlined_call_operand.vmem [shape: f32[1,32], index: 6, kind: input, shape index: {}]
  %s7 = inlined_call_operand.vmem [shape: f32[32,128], index: 7, kind: input, shape index: {}]
  %s8 = inlined_call_operand.vmem [shape: f32[1,128], index: 8, kind: input, shape index: {}]
  %s9 = inlined_call_operand.hbm [shape: f32[2,128], index: 9, kind: output, shape index: {}]
  %s10 = sld [smem:[#allocation0]]
  $region46: #{tpu_custom_call.1} parent=0
    _
  %s12 = ssub.s32 1, %s10
  %s13 = scalar_select 0, %s12, %s10
  $region1: #{tpu_custom_call.1} parent=0
    #allocation2 [shape = 'u8[1024]{0}', space=vmem, size = 0x400, scoped, tag = 'output window, operand 0, single buffered']
    #allocation3 [shape = 's32[1]{0}', space=sflag, size = 0x4, scoped, tag = 'scoped memory for tpu_custom_call.1']
    %14 = vsyncpa [#allocation3], 0
    // Predicated region
    $region2: #{tpu_custom_call.1} parent=1 // pred_check
      _
    $region3: #{tpu_custom_call.1} parent=1 // pred_check_branch
      %16 = sbr.rel (0) target = $region5
    $region4: #{tpu_custom_call.1} parent=1 // pred_region
      _
    $region5: #{tpu_custom_call.1} parent=1 // pred_fallthru
      _
    // Predicated region
    $region6: #{tpu_custom_call.1} parent=1 // pred_check
      _
    $region7: #{tpu_custom_call.1} parent=1 // pred_check_branch
      %18 = sbr.rel (0) target = $region9
    $region8: #{tpu_custom_call.1} parent=1 // pred_region
      _
    $region9: #{tpu_custom_call.1} parent=1 // pred_fallthru
      _
    // Predicated region
    $region10: #{tpu_custom_call.1} parent=1 // pred_check
      _
    $region11: #{tpu_custom_call.1} parent=1 // pred_check_branch
      %20 = sbr.rel (0) target = $region13
    $region12: #{tpu_custom_call.1} parent=1 // pred_region
      _
    $region13: #{tpu_custom_call.1} parent=1 // pred_fallthru
      _
    // Predicated region
    $region14: #{tpu_custom_call.1} parent=1 // pred_check
      _
    $region15: #{tpu_custom_call.1} parent=1 // pred_check_branch
      %22 = sbr.rel (0) target = $region17
    $region16: #{tpu_custom_call.1} parent=1 // pred_region
      _
    $region17: #{tpu_custom_call.1} parent=1 // pred_fallthru
      _
    // Predicated region
    $region18: #{tpu_custom_call.1} parent=1 // pred_check
      _
    $region19: #{tpu_custom_call.1} parent=1 // pred_check_branch
      %24 = sbr.rel (0) target = $region21
    $region20: #{tpu_custom_call.1} parent=1 // pred_region
      _
    $region21: #{tpu_custom_call.1} parent=1 // pred_fallthru
      _
    // Predicated region
    $region22: #{tpu_custom_call.1} parent=1 // pred_check
      _
    $region23: #{tpu_custom_call.1} parent=1 // pred_check_branch
      %26 = sbr.rel (0) target = $region25
    $region24: #{tpu_custom_call.1} parent=1 // pred_region
      _
    $region25: #{tpu_custom_call.1} parent=1 // pred_fallthru
      _
    // Predicated region
    $region26: #{tpu_custom_call.1} parent=1 // pred_check
      _
    $region27: #{tpu_custom_call.1} parent=1 // pred_check_branch
      %28 = sbr.rel (0) target = $region29
    $region28: #{tpu_custom_call.1} parent=1 // pred_region
      _
    $region29: #{tpu_custom_call.1} parent=1 // pred_fallthru
      _
    // Predicated region
    $region30: #{tpu_custom_call.1} parent=1 // pred_check
      _
    $region31: #{tpu_custom_call.1} parent=1 // pred_check_branch
      %30 = sbr.rel (0) target = $region33
    $region32: #{tpu_custom_call.1} parent=1 // pred_region
      _
    $region33: #{tpu_custom_call.1} parent=1 // pred_fallthru
      _
    // Predicated region
    $region34: #{tpu_custom_call.1} parent=1 // pred_check
      _
    $region35: #{tpu_custom_call.1} parent=1 // pred_check_branch
      %32 = sbr.rel (0) target = $region37
    $region36: #{tpu_custom_call.1} parent=1 // pred_region
      _
    $region37: #{tpu_custom_call.1} parent=1 // pred_fallthru
      _
    %v33 = vld [vmem:[%s0] sm:$0xff]
    %v34 = vld [vmem:[%s0 + $0x8] sm:$0xff]
    %v35 = vld [vmem:[%s0 + $0x10] sm:$0xff]
    %v36 = vld [vmem:[%s0 + $0x18] sm:$0xff]
    %v37 = vld [vmem:[%s1] sm:$0xf]
    %s38 = scalar_lea.vmem %s1, 4
    %v39 = vld [vmem:[%s38] sm:$0xf]
    %v44 = vcombine.high %v33, %v33
    %v46 = vunpack.c.l.s4 1983009808
    %v47 = vunpack.c.0.s8 %v46
    %v48 = vlaneseq
    %v49 = vshrl.u32 %v48, 7
    %v50 = vsub.s32 %v47, %v49
    %v51 = vrot.slane %v33, %v50
    %v53 = vunpack.c.l.s4 1983009808
    %v54 = vunpack.c.0.s8 %v53
    %v55 = vlaneseq
    %v56 = vshrl.u32 %v55, 7
    %v57 = vsub.s32 %v54, %v56
    %v58 = vrot.slane %v44, %v57
    %v59 = vcombine.high %v51, %v51
    %v60 = vcombine.high %v58, %v58
    %v61 = vcombine.high %v34, %v34
    %v63 = vunpack.c.l.s4 1983009808
    %v64 = vunpack.c.0.s8 %v63
    %v65 = vlaneseq
    %v66 = vshrl.u32 %v65, 7
    %v67 = vsub.s32 %v64, %v66
    %v68 = vrot.slane %v34, %v67
    %v70 = vunpack.c.l.s4 1983009808
    %v71 = vunpack.c.0.s8 %v70
    %v72 = vlaneseq
    %v73 = vshrl.u32 %v72, 7
    %v74 = vsub.s32 %v71, %v73
    %v75 = vrot.slane %v61, %v74
    %v76 = vcombine.high %v68, %v68
    %v77 = vcombine.high %v75, %v75
    %v78 = vcombine.high %v35, %v35
    %v80 = vunpack.c.l.s4 1983009808
    %v81 = vunpack.c.0.s8 %v80
    %v82 = vlaneseq
    %v83 = vshrl.u32 %v82, 7
    %v84 = vsub.s32 %v81, %v83
    %v85 = vrot.slane %v35, %v84
    %v87 = vunpack.c.l.s4 1983009808
    %v88 = vunpack.c.0.s8 %v87
    %v89 = vlaneseq
    %v90 = vshrl.u32 %v89, 7
    %v91 = vsub.s32 %v88, %v90
    %v92 = vrot.slane %v78, %v91
    %v93 = vcombine.high %v85, %v85
    %v94 = vcombine.high %v92, %v92
    %v95 = vcombine.high %v36, %v36
    %v97 = vunpack.c.l.s4 1983009808
    %v98 = vunpack.c.0.s8 %v97
    %v99 = vlaneseq
    %v100 = vshrl.u32 %v99, 7
    %v101 = vsub.s32 %v98, %v100
    %v102 = vrot.slane %v36, %v101
    %v104 = vunpack.c.l.s4 1983009808
    %v105 = vunpack.c.0.s8 %v104
    %v106 = vlaneseq
    %v107 = vshrl.u32 %v106, 7
    %v108 = vsub.s32 %v105, %v107
    %v109 = vrot.slane %v95, %v108
    %v110 = vcombine.high %v102, %v102
    %v111 = vcombine.high %v109, %v109
    %vm112 = vcmask 1040384
    %vm113 = vcmask 1042434
    %vm114 = vmor %vm112, %vm113
    %vm115 = vcmask 1044484
    %vm116 = vmor %vm114, %vm115
    %vm117 = vcmask 1046534
    %vm118 = vmor %vm116, %vm117
    %v119 = vrot.slane %v51, 7
    %v120 = vrot.slane %v119, 2
    %v121 = vrot.slane %v59, 7
    %v122 = vsel %vm118, %v120, %v121
    %v123 = vrot.slane %v121, 2
    %v124 = vrot.slane %v58, 7
    %v125 = vsel %vm118, %v123, %v124
    %v126 = vrot.slane %v124, 2
    %v127 = vrot.slane %v60, 7
    %v128 = vsel %vm118, %v126, %v127
    %v129 = vrot.slane %v127, 2
    %v130 = vrot.slane %v68, 7
    %v131 = vsel %vm118, %v129, %v130
    %v132 = vrot.slane %v130, 2
    %v133 = vrot.slane %v76, 7
    %v134 = vsel %vm118, %v132, %v133
    %v135 = vrot.slane %v133, 2
    %v136 = vrot.slane %v75, 7
    %v137 = vsel %vm118, %v135, %v136
    %v138 = vrot.slane %v136, 2
    %v139 = vrot.slane %v77, 7
    %v140 = vsel %vm118, %v138, %v139
    %v141 = vrot.slane %v85, 7
    %v142 = vrot.slane %v141, 2
    %v143 = vrot.slane %v93, 7
    %v144 = vsel %vm118, %v142, %v143
    %v145 = vrot.slane %v143, 2
    %v146 = vrot.slane %v92, 7
    %v147 = vsel %vm118, %v145, %v146
    %v148 = vrot.slane %v146, 2
    %v149 = vrot.slane %v94, 7
    %v150 = vsel %vm118, %v148, %v149
    %v151 = vrot.slane %v149, 2
    %v152 = vrot.slane %v102, 7
    %v153 = vsel %vm118, %v151, %v152
    %v154 = vrot.slane %v152, 2
    %v155 = vrot.slane %v110, 7
    %v156 = vsel %vm118, %v154, %v155
    %v157 = vrot.slane %v155, 2
    %v158 = vrot.slane %v109, 7
    %v159 = vsel %vm118, %v157, %v158
    %v160 = vrot.slane %v158, 2
    %v161 = vrot.slane %v111, 7
    %v162 = vsel %vm118, %v160, %v161
    %v163 = vcombine.low %v122, %v125
    %v164 = vcombine.low %v128, %v131
    %v166 = vunpack.c.l.s4 1983009808
    %v167 = vunpack.c.0.s8 %v166
    %v168 = vlaneseq
    %v169 = vshrl.u32 %v168, 7
    %v170 = vsub.s32 %v167, %v169
    %v171 = vrot.slane %v163, %v170
    %v173 = vunpack.c.l.s4 1983009808
    %v174 = vunpack.c.0.s8 %v173
    %v175 = vlaneseq
    %v176 = vshrl.u32 %v175, 7
    %v177 = vsub.s32 %v174, %v176
    %v178 = vrot.slane %v164, %v177
    %v179 = vcombine.low %v171, %v178
    %v180 = vcombine.low %v134, %v137
    %v181 = vcombine.low %v140, %v144
    %v183 = vunpack.c.l.s4 1983009808
    %v184 = vunpack.c.0.s8 %v183
    %v185 = vlaneseq
    %v186 = vshrl.u32 %v185, 7
    %v187 = vsub.s32 %v184, %v186
    %v188 = vrot.slane %v180, %v187
    %v190 = vunpack.c.l.s4 1983009808
    %v191 = vunpack.c.0.s8 %v190
    %v192 = vlaneseq
    %v193 = vshrl.u32 %v192, 7
    %v194 = vsub.s32 %v191, %v193
    %v195 = vrot.slane %v181, %v194
    %v196 = vcombine.low %v188, %v195
    %v197 = vcombine.low %v147, %v150
    %v198 = vcombine.low %v153, %v156
    %v200 = vunpack.c.l.s4 1983009808
    %v201 = vunpack.c.0.s8 %v200
    %v202 = vlaneseq
    %v203 = vshrl.u32 %v202, 7
    %v204 = vsub.s32 %v201, %v203
    %v205 = vrot.slane %v197, %v204
    %v207 = vunpack.c.l.s4 1983009808
    %v208 = vunpack.c.0.s8 %v207
    %v209 = vlaneseq
    %v210 = vshrl.u32 %v209, 7
    %v211 = vsub.s32 %v208, %v210
    %v212 = vrot.slane %v198, %v211
    %v213 = vcombine.low %v205, %v212
    %v214 = vcombine.low %v159, %v162
    %v216 = vunpack.c.l.s4 1983009808
    %v217 = vunpack.c.0.s8 %v216
    %v218 = vlaneseq
    %v219 = vshrl.u32 %v218, 7
    %v220 = vsub.s32 %v217, %v219
    %v221 = vrot.slane %v214, %v220
    %vm222 = vcmask 31744
    %v223 = vsel %vm222, %v179, 0
    %v225 = vsel %vm222, %v196, 0
    %v227 = vsel %vm222, %v213, 0
    %v229 = vsel %vm222, %v221, 0
    %vm231 = vcmask 1043456
    %v233 = vsel %vm231, %v39, 0
    %235 = vmatprep.subr.mxu0 0.0
    %236 = vmatpush1.msra.mxu0 0.0
    %237 = vmatprep.subr.mxu0 0.0
    %238 = vmatpush1.msra.mxu0 0.0
    %239 = vmatprep.subr.mxu0 0.0
    %240 = vmatpush1.msra.mxu0 0.0
    %241 = vmatprep.subr.mxu0 0.0
    %242 = vmatpush1.msra.mxu0 0.0
    %243 = vmatprep.subr.mxu0 0.0
    %244 = vmatpush1.msra.mxu0 0.0
    %245 = vmatprep.subr.mxu0 0.0
    %246 = vmatpush1.msra.mxu0 0.0
    %247 = vmatprep.subr.mxu0 0.0
    %248 = vmatpush1.msra.mxu0 0.0
    %249 = vmatprep.subr.mxu0 0.0
    %250 = vmatpush1.msra.mxu0 0.0
    %251 = vmatprep.subr.mxu0 0.0
    %252 = vmatpush1.msra.mxu0 0.0
    %253 = vmatprep.subr.mxu0 0.0
    %254 = vmatpush1.msra.mxu0 0.0
    %255 = vmatprep.subr.mxu0 0.0
    %256 = vmatpush1.msra.mxu0 0.0
    %257 = vmatprep.subr.mxu0 0.0
    %258 = vmatpush1.msra.mxu0 0.0
    %259 = vmatprep.subr.mxu0 0.0
    %260 = vmatpush1.msra.mxu0 0.0
    %261 = vmatprep.subr.mxu0 0.0
    %262 = vmatpush1.msra.mxu0 0.0
    %263 = vmatprep.subr.mxu0 0.0
    %264 = vmatpush1.msra.mxu0 0.0
    %265 = vmatprep.subr.mxu0 0.0
    %266 = vmatpush1.msra.mxu0 %v233
    %267 = vmatprep.subr.mxu0 0.0
    %268 = vmatpush2.msra.mxu0 0.0
    %269 = vmatprep.subr.mxu0 0.0
    %270 = vmatpush2.msra.mxu0 0.0
    %271 = vmatprep.subr.mxu0 0.0
    %272 = vmatpush2.msra.mxu0 0.0
    %273 = vmatprep.subr.mxu0 0.0
    %274 = vmatpush2.msra.mxu0 0.0
    %275 = vmatprep.subr.mxu0 0.0
    %276 = vmatpush2.msra.mxu0 0.0
    %277 = vmatprep.subr.mxu0 0.0
    %278 = vmatpush2.msra.mxu0 0.0
    %279 = vmatprep.subr.mxu0 0.0
    %280 = vmatpush2.msra.mxu0 0.0
    %281 = vmatprep.subr.mxu0 0.0
    %282 = vmatpush2.msra.mxu0 0.0
    %283 = vmatprep.subr.mxu0 0.0
    %284 = vmatpush2.msra.mxu0 0.0
    %285 = vmatprep.subr.mxu0 0.0
    %286 = vmatpush2.msra.mxu0 0.0
    %287 = vmatprep.subr.mxu0 0.0
    %288 = vmatpush2.msra.mxu0 0.0
    %289 = vmatprep.subr.mxu0 0.0
    %290 = vmatpush2.msra.mxu0 0.0
    %291 = vmatprep.subr.mxu0 0.0
    %292 = vmatpush2.msra.mxu0 0.0
    %293 = vmatprep.subr.mxu0 0.0
    %294 = vmatpush2.msra.mxu0 0.0
    %295 = vmatprep.subr.mxu0 0.0
    %296 = vmatpush2.msra.mxu0 0.0
    %297 = vmatprep.subr.mxu0 0.0
    %298 = vmatpush2.msra.mxu0 0.0
    %299 = vmatprep.mubr.f32.mxu0 0.0
    %300 = vmatmul.mubr.f32.gmra.mxu0 %v223
    %v301 = vpop.f32.mrf.mxu0
    %v302 = vadd.f32 0.0, %v301
    %v303 = vpop.f32.mrf.mxu0
    %304 = vmatprep.mubr.f32.mxu0 0.0
    %305 = vmatmul.mubr.f32.gmra.mxu0 %v225
    %v306 = vpop.f32.mrf.mxu0
    %v307 = vadd.f32 0.0, %v306
    %v308 = vpop.f32.mrf.mxu0
    %309 = vmatprep.mubr.f32.mxu0 0.0
    %310 = vmatmul.mubr.f32.gmra.mxu0 %v227
    %v311 = vpop.f32.mrf.mxu0
    %v312 = vadd.f32 0.0, %v311
    %v313 = vpop.f32.mrf.mxu0
    %314 = vmatprep.mubr.f32.mxu0 0.0
    %315 = vmatmul.mubr.f32.gmra.mxu0 %v229
    %v316 = vpop.f32.mrf.mxu0
    %v317 = vadd.f32 0.0, %v316
    %v318 = vpop.f32.mrf.mxu0
    %319 = vdwg.mxu0
    %v320 = vcombine.low %v51, %v59
    %v321 = vcombine.low %v58, %v60
    %v323 = vunpack.c.l.s4 1983009808
    %v324 = vunpack.c.0.s8 %v323
    %v325 = vlaneseq
    %v326 = vshrl.u32 %v325, 7
    %v327 = vsub.s32 %v324, %v326
    %v328 = vrot.slane %v320, %v327
    %v330 = vunpack.c.l.s4 1983009808
    %v331 = vunpack.c.0.s8 %v330
    %v332 = vlaneseq
    %v333 = vshrl.u32 %v332, 7
    %v334 = vsub.s32 %v331, %v333
    %v335 = vrot.slane %v321, %v334
    %v336 = vcombine.low %v328, %v335
    %v337 = vcombine.low %v68, %v76
    %v338 = vcombine.low %v75, %v85
    %v340 = vunpack.c.l.s4 1983009808
    %v341 = vunpack.c.0.s8 %v340
    %v342 = vlaneseq
    %v343 = vshrl.u32 %v342, 7
    %v344 = vsub.s32 %v341, %v343
    %v345 = vrot.slane %v337, %v344
    %v347 = vunpack.c.l.s4 1983009808
    %v348 = vunpack.c.0.s8 %v347
    %v349 = vlaneseq
    %v350 = vshrl.u32 %v349, 7
    %v351 = vsub.s32 %v348, %v350
    %v352 = vrot.slane %v338, %v351
    %v353 = vcombine.low %v345, %v352
    %v354 = vcombine.low %v93, %v92
    %v355 = vcombine.low %v94, %v102
    %v357 = vunpack.c.l.s4 1983009808
    %v358 = vunpack.c.0.s8 %v357
    %v359 = vlaneseq
    %v360 = vshrl.u32 %v359, 7
    %v361 = vsub.s32 %v358, %v360
    %v362 = vrot.slane %v354, %v361
    %v364 = vunpack.c.l.s4 1983009808
    %v365 = vunpack.c.0.s8 %v364
    %v366 = vlaneseq
    %v367 = vshrl.u32 %v366, 7
    %v368 = vsub.s32 %v365, %v367
    %v369 = vrot.slane %v355, %v368
    %v370 = vcombine.low %v362, %v369
    %v371 = vcombine.low %v110, %v109
    %v373 = vunpack.c.l.s4 1983009808
    %v374 = vunpack.c.0.s8 %v373
    %v375 = vlaneseq
    %v376 = vshrl.u32 %v375, 7
    %v377 = vsub.s32 %v374, %v376
    %v378 = vrot.slane %v371, %v377
    %v379 = vsel %vm222, %v336, 0
    %v381 = vsel %vm222, %v353, 0
    %v383 = vsel %vm222, %v370, 0
    %v385 = vsel %vm222, %v378, 0
    %v388 = vsel %vm231, %v37, 0
    %390 = vmatprep.subr.mxu0 0.0
    %391 = vmatpush1.msra.mxu0 0.0
    %392 = vmatprep.subr.mxu0 0.0
    %393 = vmatpush1.msra.mxu0 0.0
    %394 = vmatprep.subr.mxu0 0.0
    %395 = vmatpush1.msra.mxu0 0.0
    %396 = vmatprep.subr.mxu0 0.0
    %397 = vmatpush1.msra.mxu0 0.0
    %398 = vmatprep.subr.mxu0 0.0
    %399 = vmatpush1.msra.mxu0 0.0
    %400 = vmatprep.subr.mxu0 0.0
    %401 = vmatpush1.msra.mxu0 0.0
    %402 = vmatprep.subr.mxu0 0.0
    %403 = vmatpush1.msra.mxu0 0.0
    %404 = vmatprep.subr.mxu0 0.0
    %405 = vmatpush1.msra.mxu0 0.0
    %406 = vmatprep.subr.mxu0 0.0
    %407 = vmatpush1.msra.mxu0 0.0
    %408 = vmatprep.subr.mxu0 0.0
    %409 = vmatpush1.msra.mxu0 0.0
    %410 = vmatprep.subr.mxu0 0.0
    %411 = vmatpush1.msra.mxu0 0.0
    %412 = vmatprep.subr.mxu0 0.0
    %413 = vmatpush1.msra.mxu0 0.0
    %414 = vmatprep.subr.mxu0 0.0
    %415 = vmatpush1.msra.mxu0 0.0
    %416 = vmatprep.subr.mxu0 0.0
    %417 = vmatpush1.msra.mxu0 0.0
    %418 = vmatprep.subr.mxu0 0.0
    %419 = vmatpush1.msra.mxu0 0.0
    %420 = vmatprep.subr.mxu0 0.0
    %421 = vmatpush1.msra.mxu0 %v388
    %422 = vmatprep.subr.mxu0 0.0
    %423 = vmatpush2.msra.mxu0 0.0
    %424 = vmatprep.subr.mxu0 0.0
    %425 = vmatpush2.msra.mxu0 0.0
    %426 = vmatprep.subr.mxu0 0.0
    %427 = vmatpush2.msra.mxu0 0.0
    %428 = vmatprep.subr.mxu0 0.0
    %429 = vmatpush2.msra.mxu0 0.0
    %430 = vmatprep.subr.mxu0 0.0
    %431 = vmatpush2.msra.mxu0 0.0
    %432 = vmatprep.subr.mxu0 0.0
    %433 = vmatpush2.msra.mxu0 0.0
    %434 = vmatprep.subr.mxu0 0.0
    %435 = vmatpush2.msra.mxu0 0.0
    %436 = vmatprep.subr.mxu0 0.0
    %437 = vmatpush2.msra.mxu0 0.0
    %438 = vmatprep.subr.mxu0 0.0
    %439 = vmatpush2.msra.mxu0 0.0
    %440 = vmatprep.subr.mxu0 0.0
    %441 = vmatpush2.msra.mxu0 0.0
    %442 = vmatprep.subr.mxu0 0.0
    %443 = vmatpush2.msra.mxu0 0.0
    %444 = vmatprep.subr.mxu0 0.0
    %445 = vmatpush2.msra.mxu0 0.0
    %446 = vmatprep.subr.mxu0 0.0
    %447 = vmatpush2.msra.mxu0 0.0
    %448 = vmatprep.subr.mxu0 0.0
    %449 = vmatpush2.msra.mxu0 0.0
    %450 = vmatprep.subr.mxu0 0.0
    %451 = vmatpush2.msra.mxu0 0.0
    %452 = vmatprep.subr.mxu0 0.0
    %453 = vmatpush2.msra.mxu0 0.0
    %454 = vmatprep.mubr.f32.mxu0 0.0
    %455 = vmatmul.mubr.f32.gmra.mxu0 %v379
    %v456 = vpop.f32.mrf.mxu0
    %v457 = vadd.f32 %v302, %v456
    %v458 = vpop.f32.mrf.mxu0
    %459 = vmatprep.mubr.f32.mxu0 0.0
    %460 = vmatmul.mubr.f32.gmra.mxu0 %v381
    %v461 = vpop.f32.mrf.mxu0
    %v462 = vadd.f32 %v307, %v461
    %v463 = vpop.f32.mrf.mxu0
    %464 = vmatprep.mubr.f32.mxu0 0.0
    %465 = vmatmul.mubr.f32.gmra.mxu0 %v383
    %v466 = vpop.f32.mrf.mxu0
    %v467 = vadd.f32 %v312, %v466
    %v468 = vpop.f32.mrf.mxu0
    %469 = vmatprep.mubr.f32.mxu0 0.0
    %470 = vmatmul.mubr.f32.gmra.mxu0 %v385
    %v471 = vpop.f32.mrf.mxu0
    %v472 = vadd.f32 %v317, %v471
    %v473 = vpop.f32.mrf.mxu0
    %474 = vdwg.mxu0
    %v479 = vcombine.high %v457, %v457
    %v481 = vunpack.c.l.s4 1983009808
    %v482 = vunpack.c.0.s8 %v481
    %v483 = vlaneseq
    %v484 = vshrl.u32 %v483, 7
    %v485 = vsub.s32 %v482, %v484
    %v486 = vrot.slane %v457, %v485
    %v488 = vunpack.c.l.s4 1983009808
    %v489 = vunpack.c.0.s8 %v488
    %v490 = vlaneseq
    %v491 = vshrl.u32 %v490, 7
    %v492 = vsub.s32 %v489, %v491
    %v493 = vrot.slane %v479, %v492
    %v494 = vcombine.high %v486, %v486
    %v495 = vcombine.high %v493, %v493
    %v496 = vcombine.high %v462, %v462
    %v498 = vunpack.c.l.s4 1983009808
    %v499 = vunpack.c.0.s8 %v498
    %v500 = vlaneseq
    %v501 = vshrl.u32 %v500, 7
    %v502 = vsub.s32 %v499, %v501
    %v503 = vrot.slane %v462, %v502
    %v505 = vunpack.c.l.s4 1983009808
    %v506 = vunpack.c.0.s8 %v505
    %v507 = vlaneseq
    %v508 = vshrl.u32 %v507, 7
    %v509 = vsub.s32 %v506, %v508
    %v510 = vrot.slane %v496, %v509
    %v511 = vcombine.high %v503, %v503
    %v512 = vcombine.high %v510, %v510
    %v513 = vcombine.high %v467, %v467
    %v515 = vunpack.c.l.s4 1983009808
    %v516 = vunpack.c.0.s8 %v515
    %v517 = vlaneseq
    %v518 = vshrl.u32 %v517, 7
    %v519 = vsub.s32 %v516, %v518
    %v520 = vrot.slane %v467, %v519
    %v522 = vunpack.c.l.s4 1983009808
    %v523 = vunpack.c.0.s8 %v522
    %v524 = vlaneseq
    %v525 = vshrl.u32 %v524, 7
    %v526 = vsub.s32 %v523, %v525
    %v527 = vrot.slane %v513, %v526
    %v528 = vcombine.high %v520, %v520
    %v529 = vcombine.high %v527, %v527
    %v531 = vunpack.c.l.s4 1983009808
    %v532 = vunpack.c.0.s8 %v531
    %v533 = vlaneseq
    %v534 = vshrl.u32 %v533, 7
    %v535 = vsub.s32 %v532, %v534
    %v536 = vrot.slane %v472, %v535
    %v537 = vcombine.high %v536, %v536
    %s552 = scalar_lea.vmem %s1, 8
    %v553 = vld [vmem:[%s552] sm:$0xf]
    %v554 = vcombine.low %v59, %v58
    %v555 = vcombine.low %v60, %v68
    %v557 = vunpack.c.l.s4 1983009808
    %v558 = vunpack.c.0.s8 %v557
    %v559 = vlaneseq
    %v560 = vshrl.u32 %v559, 7
    %v561 = vsub.s32 %v558, %v560
    %v562 = vrot.slane %v554, %v561
    %v564 = vunpack.c.l.s4 1983009808
    %v565 = vunpack.c.0.s8 %v564
    %v566 = vlaneseq
    %v567 = vshrl.u32 %v566, 7
    %v568 = vsub.s32 %v565, %v567
    %v569 = vrot.slane %v555, %v568
    %v570 = vcombine.low %v562, %v569
    %v571 = vcombine.low %v76, %v75
    %v572 = vcombine.low %v77, %v93
    %v574 = vunpack.c.l.s4 1983009808
    %v575 = vunpack.c.0.s8 %v574
    %v576 = vlaneseq
    %v577 = vshrl.u32 %v576, 7
    %v578 = vsub.s32 %v575, %v577
    %v579 = vrot.slane %v571, %v578
    %v581 = vunpack.c.l.s4 1983009808
    %v582 = vunpack.c.0.s8 %v581
    %v583 = vlaneseq
    %v584 = vshrl.u32 %v583, 7
    %v585 = vsub.s32 %v582, %v584
    %v586 = vrot.slane %v572, %v585
    %v587 = vcombine.low %v579, %v586
    %v588 = vcombine.low %v92, %v94
    %v589 = vcombine.low %v102, %v110
    %v591 = vunpack.c.l.s4 1983009808
    %v592 = vunpack.c.0.s8 %v591
    %v593 = vlaneseq
    %v594 = vshrl.u32 %v593, 7
    %v595 = vsub.s32 %v592, %v594
    %v596 = vrot.slane %v588, %v595
    %v598 = vunpack.c.l.s4 1983009808
    %v599 = vunpack.c.0.s8 %v598
    %v600 = vlaneseq
    %v601 = vshrl.u32 %v600, 7
    %v602 = vsub.s32 %v599, %v601
    %v603 = vrot.slane %v589, %v602
    %v604 = vcombine.low %v596, %v603
    %v605 = vcombine.low %v109, %v111
    %v607 = vunpack.c.l.s4 1983009808
    %v608 = vunpack.c.0.s8 %v607
    %v609 = vlaneseq
    %v610 = vshrl.u32 %v609, 7
    %v611 = vsub.s32 %v608, %v610
    %v612 = vrot.slane %v605, %v611
    %v613 = vsel %vm222, %v570, 0
    %v615 = vsel %vm222, %v587, 0
    %v617 = vsel %vm222, %v604, 0
    %v619 = vsel %vm222, %v612, 0
    %v622 = vsel %vm231, %v553, 0
    %624 = vmatprep.subr.mxu0 0.0
    %625 = vmatpush1.msra.mxu0 0.0
    %626 = vmatprep.subr.mxu0 0.0
    %627 = vmatpush1.msra.mxu0 0.0
    %628 = vmatprep.subr.mxu0 0.0
    %629 = vmatpush1.msra.mxu0 0.0
    %630 = vmatprep.subr.mxu0 0.0
    %631 = vmatpush1.msra.mxu0 0.0
    %632 = vmatprep.subr.mxu0 0.0
    %633 = vmatpush1.msra.mxu0 0.0
    %634 = vmatprep.subr.mxu0 0.0
    %635 = vmatpush1.msra.mxu0 0.0
    %636 = vmatprep.subr.mxu0 0.0
    %637 = vmatpush1.msra.mxu0 0.0
    %638 = vmatprep.subr.mxu0 0.0
    %639 = vmatpush1.msra.mxu0 0.0
    %640 = vmatprep.subr.mxu0 0.0
    %641 = vmatpush1.msra.mxu0 0.0
    %642 = vmatprep.subr.mxu0 0.0
    %643 = vmatpush1.msra.mxu0 0.0
    %644 = vmatprep.subr.mxu0 0.0
    %645 = vmatpush1.msra.mxu0 0.0
    %646 = vmatprep.subr.mxu0 0.0
    %647 = vmatpush1.msra.mxu0 0.0
    %648 = vmatprep.subr.mxu0 0.0
    %649 = vmatpush1.msra.mxu0 0.0
    %650 = vmatprep.subr.mxu0 0.0
    %651 = vmatpush1.msra.mxu0 0.0
    %652 = vmatprep.subr.mxu0 0.0
    %653 = vmatpush1.msra.mxu0 0.0
    %654 = vmatprep.subr.mxu0 0.0
    %655 = vmatpush1.msra.mxu0 %v622
    %656 = vmatprep.subr.mxu0 0.0
    %657 = vmatpush2.msra.mxu0 0.0
    %658 = vmatprep.subr.mxu0 0.0
    %659 = vmatpush2.msra.mxu0 0.0
    %660 = vmatprep.subr.mxu0 0.0
    %661 = vmatpush2.msra.mxu0 0.0
    %662 = vmatprep.subr.mxu0 0.0
    %663 = vmatpush2.msra.mxu0 0.0
    %664 = vmatprep.subr.mxu0 0.0
    %665 = vmatpush2.msra.mxu0 0.0
    %666 = vmatprep.subr.mxu0 0.0
    %667 = vmatpush2.msra.mxu0 0.0
    %668 = vmatprep.subr.mxu0 0.0
    %669 = vmatpush2.msra.mxu0 0.0
    %670 = vmatprep.subr.mxu0 0.0
    %671 = vmatpush2.msra.mxu0 0.0
    %672 = vmatprep.subr.mxu0 0.0
    %673 = vmatpush2.msra.mxu0 0.0
    %674 = vmatprep.subr.mxu0 0.0
    %675 = vmatpush2.msra.mxu0 0.0
    %676 = vmatprep.subr.mxu0 0.0
    %677 = vmatpush2.msra.mxu0 0.0
    %678 = vmatprep.subr.mxu0 0.0
    %679 = vmatpush2.msra.mxu0 0.0
    %680 = vmatprep.subr.mxu0 0.0
    %681 = vmatpush2.msra.mxu0 0.0
    %682 = vmatprep.subr.mxu0 0.0
    %683 = vmatpush2.msra.mxu0 0.0
    %684 = vmatprep.subr.mxu0 0.0
    %685 = vmatpush2.msra.mxu0 0.0
    %686 = vmatprep.subr.mxu0 0.0
    %687 = vmatpush2.msra.mxu0 0.0
    %688 = vmatprep.mubr.f32.mxu0 0.0
    %689 = vmatmul.mubr.f32.gmra.mxu0 %v613
    %v690 = vpop.f32.mrf.mxu0
    %v691 = vadd.f32 0.0, %v690
    %v692 = vpop.f32.mrf.mxu0
    %693 = vmatprep.mubr.f32.mxu0 0.0
    %694 = vmatmul.mubr.f32.gmra.mxu0 %v615
    %v695 = vpop.f32.mrf.mxu0
    %v696 = vadd.f32 0.0, %v695
    %v697 = vpop.f32.mrf.mxu0
    %698 = vmatprep.mubr.f32.mxu0 0.0
    %699 = vmatmul.mubr.f32.gmra.mxu0 %v617
    %v700 = vpop.f32.mrf.mxu0
    %v701 = vadd.f32 0.0, %v700
    %v702 = vpop.f32.mrf.mxu0
    %703 = vmatprep.mubr.f32.mxu0 0.0
    %704 = vmatmul.mubr.f32.gmra.mxu0 %v619
    %v705 = vpop.f32.mrf.mxu0
    %v706 = vadd.f32 0.0, %v705
    %v707 = vpop.f32.mrf.mxu0
    %708 = vdwg.mxu0
    %v713 = vcombine.high %v691, %v691
    %v715 = vunpack.c.l.s4 1983009808
    %v716 = vunpack.c.0.s8 %v715
    %v717 = vlaneseq
    %v718 = vshrl.u32 %v717, 7
    %v719 = vsub.s32 %v716, %v718
    %v720 = vrot.slane %v691, %v719
    %v722 = vunpack.c.l.s4 1983009808
    %v723 = vunpack.c.0.s8 %v722
    %v724 = vlaneseq
    %v725 = vshrl.u32 %v724, 7
    %v726 = vsub.s32 %v723, %v725
    %v727 = vrot.slane %v713, %v726
    %v728 = vcombine.high %v720, %v720
    %v729 = vcombine.high %v727, %v727
    %v730 = vcombine.high %v696, %v696
    %v732 = vunpack.c.l.s4 1983009808
    %v733 = vunpack.c.0.s8 %v732
    %v734 = vlaneseq
    %v735 = vshrl.u32 %v734, 7
    %v736 = vsub.s32 %v733, %v735
    %v737 = vrot.slane %v696, %v736
    %v739 = vunpack.c.l.s4 1983009808
    %v740 = vunpack.c.0.s8 %v739
    %v741 = vlaneseq
    %v742 = vshrl.u32 %v741, 7
    %v743 = vsub.s32 %v740, %v742
    %v744 = vrot.slane %v730, %v743
    %v745 = vcombine.high %v737, %v737
    %v746 = vcombine.high %v744, %v744
    %v747 = vcombine.high %v701, %v701
    %v749 = vunpack.c.l.s4 1983009808
    %v750 = vunpack.c.0.s8 %v749
    %v751 = vlaneseq
    %v752 = vshrl.u32 %v751, 7
    %v753 = vsub.s32 %v750, %v752
    %v754 = vrot.slane %v701, %v753
    %v756 = vunpack.c.l.s4 1983009808
    %v757 = vunpack.c.0.s8 %v756
    %v758 = vlaneseq
    %v759 = vshrl.u32 %v758, 7
    %v760 = vsub.s32 %v757, %v759
    %v761 = vrot.slane %v747, %v760
    %v762 = vcombine.high %v754, %v754
    %v763 = vcombine.high %v761, %v761
    %v765 = vunpack.c.l.s4 1983009808
    %v766 = vunpack.c.0.s8 %v765
    %v767 = vlaneseq
    %v768 = vshrl.u32 %v767, 7
    %v769 = vsub.s32 %v766, %v768
    %v770 = vrot.slane %v706, %v769
    %v771 = vcombine.high %v770, %v770
    %v786 = vadd.f32 %v486, %v720
    %v787 = vadd.f32 %v494, %v728
    %v788 = vadd.f32 %v493, %v727
    %v789 = vadd.f32 %v495, %v729
    %v790 = vadd.f32 %v503, %v737
    %v791 = vadd.f32 %v511, %v745
    %v792 = vadd.f32 %v510, %v744
    %v793 = vadd.f32 %v512, %v746
    %v794 = vadd.f32 %v520, %v754
    %v795 = vadd.f32 %v528, %v762
    %v796 = vadd.f32 %v527, %v761
    %v797 = vadd.f32 %v529, %v763
    %v798 = vadd.f32 %v536, %v770
    %v799 = vadd.f32 %v537, %v771
    %v800 = vld [vmem:[%s2] sm:$0x1]
    %v802 = vlaneseq
    %v803 = vshrl.u32 %v802, 7
    %v804 = vsub.s32 0, %v803
    %v805 = vrot.slane %v800, %v804
    %v806 = vcombine.high %v805, %v805
    %v808 = vunpack.c.l.s4 1983009808
    %v809 = vunpack.c.0.s8 %v808
    %v810 = vlaneseq
    %v811 = vshrl.u32 %v810, 7
    %v812 = vsub.s32 %v809, %v811
    %v813 = vrot.slane %v805, %v812
    %v815 = vunpack.c.l.s4 1983009808
    %v816 = vunpack.c.0.s8 %v815
    %v817 = vlaneseq
    %v818 = vshrl.u32 %v817, 7
    %v819 = vsub.s32 %v816, %v818
    %v820 = vrot.slane %v806, %v819
    %v821 = vcombine.high %v813, %v813
    %v822 = vcombine.high %v820, %v820
    %v827 = vadd.f32 %v786, %v813
    %v828 = vadd.f32 %v787, %v821
    %v829 = vadd.f32 %v788, %v820
    %v830 = vadd.f32 %v789, %v822
    %v831 = vadd.f32 %v790, %v813
    %v832 = vadd.f32 %v791, %v821
    %v833 = vadd.f32 %v792, %v820
    %v834 = vadd.f32 %v793, %v813
    %v835 = vadd.f32 %v794, %v821
    %v836 = vadd.f32 %v795, %v820
    %v837 = vadd.f32 %v796, %v822
    %v838 = vadd.f32 %v797, %v813
    %v839 = vadd.f32 %v798, %v821
    %v840 = vadd.f32 %v799, %v820
    %v841 = vmax.f32 %v827, 0.0
    %v842 = vmax.f32 %v828, 0.0
    %v843 = vmax.f32 %v829, 0.0
    %v844 = vmax.f32 %v830, 0.0
    %v845 = vmax.f32 %v831, 0.0
    %v846 = vmax.f32 %v832, 0.0
    %v847 = vmax.f32 %v833, 0.0
    %v848 = vmax.f32 %v834, 0.0
    %v849 = vmax.f32 %v835, 0.0
    %v850 = vmax.f32 %v836, 0.0
    %v851 = vmax.f32 %v837, 0.0
    %v852 = vmax.f32 %v838, 0.0
    %v853 = vmax.f32 %v839, 0.0
    %v854 = vmax.f32 %v840, 0.0
    %v855 = vld [vmem:[%s3] sm:$0xff]
    %v856 = vld [vmem:[%s3 + $0x8] sm:$0xff]
    %v857 = vld [vmem:[%s3 + $0x10] sm:$0xff]
    %v858 = vld [vmem:[%s3 + $0x18] sm:$0xff]
    %s859 = scalar_lea.vmem %s3, 32
    %v860 = vld [vmem:[%s859] sm:$0xff]
    %v861 = vld [vmem:[%s859 + $0x8] sm:$0xff]
    %v862 = vld [vmem:[%s859 + $0x10] sm:$0xff]
    %v863 = vld [vmem:[%s859 + $0x18] sm:$0xff]
    %v878 = vrot.slane %v841, 7
    %v879 = vrot.slane %v878, 2
    %v880 = vrot.slane %v842, 7
    %v881 = vsel %vm118, %v879, %v880
    %v882 = vrot.slane %v880, 2
    %v883 = vrot.slane %v843, 7
    %v884 = vsel %vm118, %v882, %v883
    %v885 = vrot.slane %v883, 2
    %v886 = vrot.slane %v844, 7
    %v887 = vsel %vm118, %v885, %v886
    %v888 = vrot.slane %v886, 2
    %v889 = vrot.slane %v845, 7
    %v890 = vsel %vm118, %v888, %v889
    %v891 = vrot.slane %v889, 2
    %v892 = vrot.slane %v846, 7
    %v893 = vsel %vm118, %v891, %v892
    %v894 = vrot.slane %v892, 2
    %v895 = vrot.slane %v847, 7
    %v896 = vsel %vm118, %v894, %v895
    %v897 = vrot.slane %v848, 7
    %v898 = vrot.slane %v897, 2
    %v899 = vrot.slane %v849, 7
    %v900 = vsel %vm118, %v898, %v899
    %v901 = vrot.slane %v899, 2
    %v902 = vrot.slane %v850, 7
    %v903 = vsel %vm118, %v901, %v902
    %v904 = vrot.slane %v902, 2
    %v905 = vrot.slane %v851, 7
    %v906 = vsel %vm118, %v904, %v905
    %v907 = vrot.slane %v905, 2
    %v908 = vrot.slane %v852, 7
    %v909 = vsel %vm118, %v907, %v908
    %v910 = vrot.slane %v908, 2
    %v911 = vrot.slane %v853, 7
    %v912 = vsel %vm118, %v910, %v911
    %v913 = vrot.slane %v911, 2
    %v914 = vrot.slane %v854, 7
    %v915 = vsel %vm118, %v913, %v914
    %v916 = vcombine.low %v881, %v884
    %v917 = vcombine.low %v887, %v890
    %v919 = vunpack.c.l.s4 1983009808
    %v920 = vunpack.c.0.s8 %v919
    %v921 = vlaneseq
    %v922 = vshrl.u32 %v921, 7
    %v923 = vsub.s32 %v920, %v922
    %v924 = vrot.slane %v916, %v923
    %v926 = vunpack.c.l.s4 1983009808
    %v927 = vunpack.c.0.s8 %v926
    %v928 = vlaneseq
    %v929 = vshrl.u32 %v928, 7
    %v930 = vsub.s32 %v927, %v929
    %v931 = vrot.slane %v917, %v930
    %v932 = vcombine.low %v924, %v931
    %v933 = vcombine.low %v893, %v896
    %v934 = vcombine.low %v900, %v903
    %v936 = vunpack.c.l.s4 1983009808
    %v937 = vunpack.c.0.s8 %v936
    %v938 = vlaneseq
    %v939 = vshrl.u32 %v938, 7
    %v940 = vsub.s32 %v937, %v939
    %v941 = vrot.slane %v933, %v940
    %v943 = vunpack.c.l.s4 1983009808
    %v944 = vunpack.c.0.s8 %v943
    %v945 = vlaneseq
    %v946 = vshrl.u32 %v945, 7
    %v947 = vsub.s32 %v944, %v946
    %v948 = vrot.slane %v934, %v947
    %v949 = vcombine.low %v941, %v948
    %v950 = vcombine.low %v906, %v909
    %v951 = vcombine.low %v912, %v915
    %v953 = vunpack.c.l.s4 1983009808
    %v954 = vunpack.c.0.s8 %v953
    %v955 = vlaneseq
    %v956 = vshrl.u32 %v955, 7
    %v957 = vsub.s32 %v954, %v956
    %v958 = vrot.slane %v950, %v957
    %v960 = vunpack.c.l.s4 1983009808
    %v961 = vunpack.c.0.s8 %v960
    %v962 = vlaneseq
    %v963 = vshrl.u32 %v962, 7
    %v964 = vsub.s32 %v961, %v963
    %v965 = vrot.slane %v951, %v964
    %v966 = vcombine.low %v958, %v965
    %vm967 = vcmask 261120
    %v968 = vsel %vm967, %v932, 0
    %v970 = vsel %vm967, %v949, 0
    %v972 = vsel %vm967, %v966, 0
    %974 = vmatprep.subr.mxu0 0.0
    %975 = vmatpush1.msra.mxu0 0.0
    %976 = vmatprep.subr.mxu0 0.0
    %977 = vmatpush1.msra.mxu0 0.0
    %978 = vmatprep.subr.mxu0 0.0
    %979 = vmatpush1.msra.mxu0 0.0
    %980 = vmatprep.subr.mxu0 0.0
    %981 = vmatpush1.msra.mxu0 0.0
    %982 = vmatprep.subr.mxu0 0.0
    %983 = vmatpush1.msra.mxu0 0.0
    %984 = vmatprep.subr.mxu0 0.0
    %985 = vmatpush1.msra.mxu0 0.0
    %986 = vmatprep.subr.mxu0 0.0
    %987 = vmatpush1.msra.mxu0 0.0
    %988 = vmatprep.subr.mxu0 0.0
    %989 = vmatpush1.msra.mxu0 0.0
    %990 = vmatprep.subr.mxu0 0.0
    %991 = vmatpush1.msra.mxu0 0.0
    %992 = vmatprep.subr.mxu0 0.0
    %993 = vmatpush1.msra.mxu0 0.0
    %994 = vmatprep.subr.mxu0 0.0
    %995 = vmatpush1.msra.mxu0 0.0
    %996 = vmatprep.subr.mxu0 0.0
    %997 = vmatpush1.msra.mxu0 0.0
    %998 = vmatprep.subr.mxu0 0.0
    %999 = vmatpush1.msra.mxu0 %v863
    %1000 = vmatprep.subr.mxu0 0.0
    %1001 = vmatpush1.msra.mxu0 %v862
    %1002 = vmatprep.subr.mxu0 0.0
    %1003 = vmatpush1.msra.mxu0 %v861
    %1004 = vmatprep.subr.mxu0 0.0
    %1005 = vmatpush1.msra.mxu0 %v860
    %1006 = vmatprep.subr.mxu0 0.0
    %1007 = vmatpush2.msra.mxu0 0.0
    %1008 = vmatprep.subr.mxu0 0.0
    %1009 = vmatpush2.msra.mxu0 0.0
    %1010 = vmatprep.subr.mxu0 0.0
    %1011 = vmatpush2.msra.mxu0 0.0
    %1012 = vmatprep.subr.mxu0 0.0
    %1013 = vmatpush2.msra.mxu0 0.0
    %1014 = vmatprep.subr.mxu0 0.0
    %1015 = vmatpush2.msra.mxu0 0.0
    %1016 = vmatprep.subr.mxu0 0.0
    %1017 = vmatpush2.msra.mxu0 0.0
    %1018 = vmatprep.subr.mxu0 0.0
    %1019 = vmatpush2.msra.mxu0 0.0
    %1020 = vmatprep.subr.mxu0 0.0
    %1021 = vmatpush2.msra.mxu0 0.0
    %1022 = vmatprep.subr.mxu0 0.0
    %1023 = vmatpush2.msra.mxu0 0.0
    %1024 = vmatprep.subr.mxu0 0.0
    %1025 = vmatpush2.msra.mxu0 0.0
    %1026 = vmatprep.subr.mxu0 0.0
    %1027 = vmatpush2.msra.mxu0 0.0
    %1028 = vmatprep.subr.mxu0 0.0
    %1029 = vmatpush2.msra.mxu0 0.0
    %1030 = vmatprep.subr.mxu0 0.0
    %1031 = vmatpush2.msra.mxu0 0.0
    %1032 = vmatprep.subr.mxu0 0.0
    %1033 = vmatpush2.msra.mxu0 0.0
    %1034 = vmatprep.subr.mxu0 0.0
    %1035 = vmatpush2.msra.mxu0 0.0
    %1036 = vmatprep.subr.mxu0 0.0
    %1037 = vmatpush2.msra.mxu0 0.0
    %1038 = vmatprep.mubr.f32.mxu0 0.0
    %1039 = vmatmul.mubr.f32.gmra.mxu0 %v968
    %v1040 = vpop.f32.mrf.mxu0
    %v1041 = vadd.f32 0.0, %v1040
    %v1042 = vpop.f32.mrf.mxu0
    %1043 = vmatprep.mubr.f32.mxu0 0.0
    %1044 = vmatmul.mubr.f32.gmra.mxu0 %v970
    %v1045 = vpop.f32.mrf.mxu0
    %v1046 = vadd.f32 0.0, %v1045
    %v1047 = vpop.f32.mrf.mxu0
    %1048 = vmatprep.mubr.f32.mxu0 0.0
    %1049 = vmatmul.mubr.f32.gmra.mxu0 %v972
    %v1050 = vpop.f32.mrf.mxu0
    %v1051 = vadd.f32 0.0, %v1050
    %v1052 = vpop.f32.mrf.mxu0
    %1053 = vdwg.mxu0
    %v1054 = vcombine.low %v841, %v842
    %v1055 = vcombine.low %v843, %v844
    %v1057 = vunpack.c.l.s4 1983009808
    %v1058 = vunpack.c.0.s8 %v1057
    %v1059 = vlaneseq
    %v1060 = vshrl.u32 %v1059, 7
    %v1061 = vsub.s32 %v1058, %v1060
    %v1062 = vrot.slane %v1054, %v1061
    %v1064 = vunpack.c.l.s4 1983009808
    %v1065 = vunpack.c.0.s8 %v1064
    %v1066 = vlaneseq
    %v1067 = vshrl.u32 %v1066, 7
    %v1068 = vsub.s32 %v1065, %v1067
    %v1069 = vrot.slane %v1055, %v1068
    %v1070 = vcombine.low %v1062, %v1069
    %v1071 = vcombine.low %v845, %v846
    %v1072 = vcombine.low %v848, %v849
    %v1074 = vunpack.c.l.s4 1983009808
    %v1075 = vunpack.c.0.s8 %v1074
    %v1076 = vlaneseq
    %v1077 = vshrl.u32 %v1076, 7
    %v1078 = vsub.s32 %v1075, %v1077
    %v1079 = vrot.slane %v1071, %v1078
    %v1081 = vunpack.c.l.s4 1983009808
    %v1082 = vunpack.c.0.s8 %v1081
    %v1083 = vlaneseq
    %v1084 = vshrl.u32 %v1083, 7
    %v1085 = vsub.s32 %v1082, %v1084
    %v1086 = vrot.slane %v1072, %v1085
    %v1087 = vcombine.low %v1079, %v1086
    %v1088 = vcombine.low %v850, %v851
    %v1089 = vcombine.low %v852, %v853
    %v1091 = vunpack.c.l.s4 1983009808
    %v1092 = vunpack.c.0.s8 %v1091
    %v1093 = vlaneseq
    %v1094 = vshrl.u32 %v1093, 7
    %v1095 = vsub.s32 %v1092, %v1094
    %v1096 = vrot.slane %v1088, %v1095
    %v1098 = vunpack.c.l.s4 1983009808
    %v1099 = vunpack.c.0.s8 %v1098
    %v1100 = vlaneseq
    %v1101 = vshrl.u32 %v1100, 7
    %v1102 = vsub.s32 %v1099, %v1101
    %v1103 = vrot.slane %v1089, %v1102
    %v1104 = vcombine.low %v1096, %v1103
    %v1105 = vsel %vm967, %v1070, 0
    %v1107 = vsel %vm967, %v1087, 0
    %v1109 = vsel %vm967, %v1104, 0
    %1111 = vmatprep.subr.mxu0 0.0
    %1112 = vmatpush1.msra.mxu0 0.0
    %1113 = vmatprep.subr.mxu0 0.0
    %1114 = vmatpush1.msra.mxu0 0.0
    %1115 = vmatprep.subr.mxu0 0.0
    %1116 = vmatpush1.msra.mxu0 0.0
    %1117 = vmatprep.subr.mxu0 0.0
    %1118 = vmatpush1.msra.mxu0 0.0
    %1119 = vmatprep.subr.mxu0 0.0
    %1120 = vmatpush1.msra.mxu0 0.0
    %1121 = vmatprep.subr.mxu0 0.0
    %1122 = vmatpush1.msra.mxu0 0.0
    %1123 = vmatprep.subr.mxu0 0.0
    %1124 = vmatpush1.msra.mxu0 0.0
    %1125 = vmatprep.subr.mxu0 0.0
    %1126 = vmatpush1.msra.mxu0 0.0
    %1127 = vmatprep.subr.mxu0 0.0
    %1128 = vmatpush1.msra.mxu0 0.0
    %1129 = vmatprep.subr.mxu0 0.0
    %1130 = vmatpush1.msra.mxu0 0.0
    %1131 = vmatprep.subr.mxu0 0.0
    %1132 = vmatpush1.msra.mxu0 0.0
    %1133 = vmatprep.subr.mxu0 0.0
    %1134 = vmatpush1.msra.mxu0 0.0
    %1135 = vmatprep.subr.mxu0 0.0
    %1136 = vmatpush1.msra.mxu0 %v858
    %1137 = vmatprep.subr.mxu0 0.0
    %1138 = vmatpush1.msra.mxu0 %v857
    %1139 = vmatprep.subr.mxu0 0.0
    %1140 = vmatpush1.msra.mxu0 %v856
    %1141 = vmatprep.subr.mxu0 0.0
    %1142 = vmatpush1.msra.mxu0 %v855
    %1143 = vmatprep.subr.mxu0 0.0
    %1144 = vmatpush2.msra.mxu0 0.0
    %1145 = vmatprep.subr.mxu0 0.0
    %1146 = vmatpush2.msra.mxu0 0.0
    %1147 = vmatprep.subr.mxu0 0.0
    %1148 = vmatpush2.msra.mxu0 0.0
    %1149 = vmatprep.subr.mxu0 0.0
    %1150 = vmatpush2.msra.mxu0 0.0
    %1151 = vmatprep.subr.mxu0 0.0
    %1152 = vmatpush2.msra.mxu0 0.0
    %1153 = vmatprep.subr.mxu0 0.0
    %1154 = vmatpush2.msra.mxu0 0.0
    %1155 = vmatprep.subr.mxu0 0.0
    %1156 = vmatpush2.msra.mxu0 0.0
    %1157 = vmatprep.subr.mxu0 0.0
    %1158 = vmatpush2.msra.mxu0 0.0
    %1159 = vmatprep.subr.mxu0 0.0
    %1160 = vmatpush2.msra.mxu0 0.0
    %1161 = vmatprep.subr.mxu0 0.0
    %1162 = vmatpush2.msra.mxu0 0.0
    %1163 = vmatprep.subr.mxu0 0.0
    %1164 = vmatpush2.msra.mxu0 0.0
    %1165 = vmatprep.subr.mxu0 0.0
    %1166 = vmatpush2.msra.mxu0 0.0
    %1167 = vmatprep.subr.mxu0 0.0
    %1168 = vmatpush2.msra.mxu0 0.0
    %1169 = vmatprep.subr.mxu0 0.0
    %1170 = vmatpush2.msra.mxu0 0.0
    %1171 = vmatprep.subr.mxu0 0.0
    %1172 = vmatpush2.msra.mxu0 0.0
    %1173 = vmatprep.subr.mxu0 0.0
    %1174 = vmatpush2.msra.mxu0 0.0
    %1175 = vmatprep.mubr.f32.mxu0 0.0
    %1176 = vmatmul.mubr.f32.gmra.mxu0 %v1105
    %v1177 = vpop.f32.mrf.mxu0
    %v1178 = vadd.f32 %v1041, %v1177
    %v1179 = vpop.f32.mrf.mxu0
    %1180 = vmatprep.mubr.f32.mxu0 0.0
    %1181 = vmatmul.mubr.f32.gmra.mxu0 %v1107
    %v1182 = vpop.f32.mrf.mxu0
    %v1183 = vadd.f32 %v1046, %v1182
    %v1184 = vpop.f32.mrf.mxu0
    %1185 = vmatprep.mubr.f32.mxu0 0.0
    %1186 = vmatmul.mubr.f32.gmra.mxu0 %v1109
    %v1187 = vpop.f32.mrf.mxu0
    %v1188 = vadd.f32 %v1051, %v1187
    %v1189 = vpop.f32.mrf.mxu0
    %1190 = vdwg.mxu0
    %v1194 = vcombine.high %v1178, %v1178
    %v1195 = vcombine.high %v1183, %v1183
    %v1196 = vcombine.high %v1188, %v1188
    %s1200 = scalar_lea.vmem %s3, 64
    %v1201 = vld [vmem:[%s1200] sm:$0xff]
    %v1202 = vld [vmem:[%s1200 + $0x8] sm:$0xff]
    %v1203 = vld [vmem:[%s1200 + $0x10] sm:$0xff]
    %v1204 = vld [vmem:[%s1200 + $0x18] sm:$0xff]
    %v1205 = vcombine.low %v842, %v843
    %v1206 = vcombine.low %v844, %v845
    %v1208 = vunpack.c.l.s4 1983009808
    %v1209 = vunpack.c.0.s8 %v1208
    %v1210 = vlaneseq
    %v1211 = vshrl.u32 %v1210, 7
    %v1212 = vsub.s32 %v1209, %v1211
    %v1213 = vrot.slane %v1205, %v1212
    %v1215 = vunpack.c.l.s4 1983009808
    %v1216 = vunpack.c.0.s8 %v1215
    %v1217 = vlaneseq
    %v1218 = vshrl.u32 %v1217, 7
    %v1219 = vsub.s32 %v1216, %v1218
    %v1220 = vrot.slane %v1206, %v1219
    %v1221 = vcombine.low %v1213, %v1220
    %v1222 = vcombine.low %v846, %v847
    %v1223 = vcombine.low %v849, %v850
    %v1225 = vunpack.c.l.s4 1983009808
    %v1226 = vunpack.c.0.s8 %v1225
    %v1227 = vlaneseq
    %v1228 = vshrl.u32 %v1227, 7
    %v1229 = vsub.s32 %v1226, %v1228
    %v1230 = vrot.slane %v1222, %v1229
    %v1232 = vunpack.c.l.s4 1983009808
    %v1233 = vunpack.c.0.s8 %v1232
    %v1234 = vlaneseq
    %v1235 = vshrl.u32 %v1234, 7
    %v1236 = vsub.s32 %v1233, %v1235
    %v1237 = vrot.slane %v1223, %v1236
    %v1238 = vcombine.low %v1230, %v1237
    %v1239 = vcombine.low %v851, %v852
    %v1240 = vcombine.low %v853, %v854
    %v1242 = vunpack.c.l.s4 1983009808
    %v1243 = vunpack.c.0.s8 %v1242
    %v1244 = vlaneseq
    %v1245 = vshrl.u32 %v1244, 7
    %v1246 = vsub.s32 %v1243, %v1245
    %v1247 = vrot.slane %v1239, %v1246
    %v1249 = vunpack.c.l.s4 1983009808
    %v1250 = vunpack.c.0.s8 %v1249
    %v1251 = vlaneseq
    %v1252 = vshrl.u32 %v1251, 7
    %v1253 = vsub.s32 %v1250, %v1252
    %v1254 = vrot.slane %v1240, %v1253
    %v1255 = vcombine.low %v1247, %v1254
    %v1256 = vsel %vm967, %v1221, 0
    %v1258 = vsel %vm967, %v1238, 0
    %v1260 = vsel %vm967, %v1255, 0
    %1262 = vmatprep.subr.mxu0 0.0
    %1263 = vmatpush1.msra.mxu0 0.0
    %1264 = vmatprep.subr.mxu0 0.0
    %1265 = vmatpush1.msra.mxu0 0.0
    %1266 = vmatprep.subr.mxu0 0.0
    %1267 = vmatpush1.msra.mxu0 0.0
    %1268 = vmatprep.subr.mxu0 0.0
    %1269 = vmatpush1.msra.mxu0 0.0
    %1270 = vmatprep.subr.mxu0 0.0
    %1271 = vmatpush1.msra.mxu0 0.0
    %1272 = vmatprep.subr.mxu0 0.0
    %1273 = vmatpush1.msra.mxu0 0.0
    %1274 = vmatprep.subr.mxu0 0.0
    %1275 = vmatpush1.msra.mxu0 0.0
    %1276 = vmatprep.subr.mxu0 0.0
    %1277 = vmatpush1.msra.mxu0 0.0
    %1278 = vmatprep.subr.mxu0 0.0
    %1279 = vmatpush1.msra.mxu0 0.0
    %1280 = vmatprep.subr.mxu0 0.0
    %1281 = vmatpush1.msra.mxu0 0.0
    %1282 = vmatprep.subr.mxu0 0.0
    %1283 = vmatpush1.msra.mxu0 0.0
    %1284 = vmatprep.subr.mxu0 0.0
    %1285 = vmatpush1.msra.mxu0 0.0
    %1286 = vmatprep.subr.mxu0 0.0
    %1287 = vmatpush1.msra.mxu0 %v1204
    %1288 = vmatprep.subr.mxu0 0.0
    %1289 = vmatpush1.msra.mxu0 %v1203
    %1290 = vmatprep.subr.mxu0 0.0
    %1291 = vmatpush1.msra.mxu0 %v1202
    %1292 = vmatprep.subr.mxu0 0.0
    %1293 = vmatpush1.msra.mxu0 %v1201
    %1294 = vmatprep.subr.mxu0 0.0
    %1295 = vmatpush2.msra.mxu0 0.0
    %1296 = vmatprep.subr.mxu0 0.0
    %1297 = vmatpush2.msra.mxu0 0.0
    %1298 = vmatprep.subr.mxu0 0.0
    %1299 = vmatpush2.msra.mxu0 0.0
    %1300 = vmatprep.subr.mxu0 0.0
    %1301 = vmatpush2.msra.mxu0 0.0
    %1302 = vmatprep.subr.mxu0 0.0
    %1303 = vmatpush2.msra.mxu0 0.0
    %1304 = vmatprep.subr.mxu0 0.0
    %1305 = vmatpush2.msra.mxu0 0.0
    %1306 = vmatprep.subr.mxu0 0.0
    %1307 = vmatpush2.msra.mxu0 0.0
    %1308 = vmatprep.subr.mxu0 0.0
    %1309 = vmatpush2.msra.mxu0 0.0
    %1310 = vmatprep.subr.mxu0 0.0
    %1311 = vmatpush2.msra.mxu0 0.0
    %1312 = vmatprep.subr.mxu0 0.0
    %1313 = vmatpush2.msra.mxu0 0.0
    %1314 = vmatprep.subr.mxu0 0.0
    %1315 = vmatpush2.msra.mxu0 0.0
    %1316 = vmatprep.subr.mxu0 0.0
    %1317 = vmatpush2.msra.mxu0 0.0
    %1318 = vmatprep.subr.mxu0 0.0
    %1319 = vmatpush2.msra.mxu0 0.0
    %1320 = vmatprep.subr.mxu0 0.0
    %1321 = vmatpush2.msra.mxu0 0.0
    %1322 = vmatprep.subr.mxu0 0.0
    %1323 = vmatpush2.msra.mxu0 0.0
    %1324 = vmatprep.subr.mxu0 0.0
    %1325 = vmatpush2.msra.mxu0 0.0
    %1326 = vmatprep.mubr.f32.mxu0 0.0
    %1327 = vmatmul.mubr.f32.gmra.mxu0 %v1256
    %v1328 = vpop.f32.mrf.mxu0
    %v1329 = vadd.f32 0.0, %v1328
    %v1330 = vpop.f32.mrf.mxu0
    %1331 = vmatprep.mubr.f32.mxu0 0.0
    %1332 = vmatmul.mubr.f32.gmra.mxu0 %v1258
    %v1333 = vpop.f32.mrf.mxu0
    %v1334 = vadd.f32 0.0, %v1333
    %v1335 = vpop.f32.mrf.mxu0
    %1336 = vmatprep.mubr.f32.mxu0 0.0
    %1337 = vmatmul.mubr.f32.gmra.mxu0 %v1260
    %v1338 = vpop.f32.mrf.mxu0
    %v1339 = vadd.f32 0.0, %v1338
    %v1340 = vpop.f32.mrf.mxu0
    %1341 = vdwg.mxu0
    %v1345 = vcombine.high %v1329, %v1329
    %v1346 = vcombine.high %v1334, %v1334
    %v1347 = vcombine.high %v1339, %v1339
    %v1351 = vadd.f32 %v1178, %v1329
    %v1352 = vadd.f32 %v1194, %v1345
    %v1353 = vadd.f32 %v1183, %v1334
    %v1354 = vadd.f32 %v1195, %v1346
    %v1355 = vadd.f32 %v1188, %v1339
    %v1356 = vadd.f32 %v1196, %v1347
    %v1357 = vld [vmem:[%s4] sm:$0x1]
    %v1359 = vlaneseq
    %v1360 = vshrl.u32 %v1359, 7
    %v1361 = vsub.s32 0, %v1360
    %v1362 = vrot.slane %v1357, %v1361
    %v1364 = vcombine.high %v1362, %v1362
    %v1366 = vadd.f32 %v1351, %v1362
    %v1367 = vadd.f32 %v1352, %v1364
    %v1368 = vadd.f32 %v1353, %v1362
    %v1369 = vadd.f32 %v1354, %v1362
    %v1370 = vadd.f32 %v1355, %v1364
    %v1371 = vadd.f32 %v1356, %v1362
    %v1372 = vmax.f32 %v1366, 0.0
    %v1373 = vmax.f32 %v1367, 0.0
    %v1374 = vmax.f32 %v1368, 0.0
    %v1375 = vmax.f32 %v1369, 0.0
    %v1376 = vmax.f32 %v1370, 0.0
    %v1377 = vmax.f32 %v1371, 0.0
    %v1378 = vld [vmem:[%s5] sm:$0xff]
    %v1379 = vld [vmem:[%s5 + $0x8] sm:$0xff]
    %v1380 = vld [vmem:[%s5 + $0x10] sm:$0xff]
    %v1381 = vld [vmem:[%s5 + $0x18] sm:$0xff]
    %v1382 = vld [vmem:[%s5 + $0x20] sm:$0xff]
    %v1383 = vld [vmem:[%s5 + $0x28] sm:$0xff]
    %v1384 = vld [vmem:[%s5 + $0x30] sm:$0xff]
    %v1385 = vld [vmem:[%s5 + $0x38] sm:$0xff]
    %s1386 = scalar_lea.vmem %s5, 64
    %v1387 = vld [vmem:[%s1386] sm:$0xff]
    %v1388 = vld [vmem:[%s1386 + $0x8] sm:$0xff]
    %v1389 = vld [vmem:[%s1386 + $0x10] sm:$0xff]
    %v1390 = vld [vmem:[%s1386 + $0x18] sm:$0xff]
    %v1391 = vld [vmem:[%s1386 + $0x20] sm:$0xff]
    %v1392 = vld [vmem:[%s1386 + $0x28] sm:$0xff]
    %v1393 = vld [vmem:[%s1386 + $0x30] sm:$0xff]
    %v1394 = vld [vmem:[%s1386 + $0x38] sm:$0xff]
    %v1402 = vunpack.c.l.s4 1983009808
    %v1403 = vunpack.c.0.s8 %v1402
    %v1404 = vlaneseq
    %v1405 = vshrl.u32 %v1404, 7
    %v1406 = vsub.s32 %v1403, %v1405
    %v1407 = vrot.slane %v1372, %v1406
    %v1408 = vcombine.high %v1407, %v1407
    %v1410 = vunpack.c.l.s4 1983009808
    %v1411 = vunpack.c.0.s8 %v1410
    %v1412 = vlaneseq
    %v1413 = vshrl.u32 %v1412, 7
    %v1414 = vsub.s32 %v1411, %v1413
    %v1415 = vrot.slane %v1373, %v1414
    %v1416 = vcombine.high %v1415, %v1415
    %v1418 = vunpack.c.l.s4 1983009808
    %v1419 = vunpack.c.0.s8 %v1418
    %v1420 = vlaneseq
    %v1421 = vshrl.u32 %v1420, 7
    %v1422 = vsub.s32 %v1419, %v1421
    %v1423 = vrot.slane %v1374, %v1422
    %v1424 = vcombine.high %v1423, %v1423
    %v1426 = vunpack.c.l.s4 1983009808
    %v1427 = vunpack.c.0.s8 %v1426
    %v1428 = vlaneseq
    %v1429 = vshrl.u32 %v1428, 7
    %v1430 = vsub.s32 %v1427, %v1429
    %v1431 = vrot.slane %v1375, %v1430
    %v1432 = vcombine.high %v1431, %v1431
    %v1434 = vunpack.c.l.s4 1983009808
    %v1435 = vunpack.c.0.s8 %v1434
    %v1436 = vlaneseq
    %v1437 = vshrl.u32 %v1436, 7
    %v1438 = vsub.s32 %v1435, %v1437
    %v1439 = vrot.slane %v1376, %v1438
    %v1440 = vcombine.high %v1439, %v1439
    %v1442 = vunpack.c.l.s4 1983009808
    %v1443 = vunpack.c.0.s8 %v1442
    %v1444 = vlaneseq
    %v1445 = vshrl.u32 %v1444, 7
    %v1446 = vsub.s32 %v1443, %v1445
    %v1447 = vrot.slane %v1377, %v1446
    %v1448 = vcombine.high %v1447, %v1447
    %v1449 = vrot.slane %v1407, 7
    %v1450 = vrot.slane %v1449, 2
    %v1451 = vrot.slane %v1408, 7
    %v1452 = vsel %vm118, %v1450, %v1451
    %v1453 = vrot.slane %v1451, 2
    %v1454 = vrot.slane %v1415, 7
    %v1455 = vsel %vm118, %v1453, %v1454
    %v1456 = vrot.slane %v1454, 2
    %v1457 = vrot.slane %v1416, 7
    %v1458 = vsel %vm118, %v1456, %v1457
    %v1459 = vrot.slane %v1457, 2
    %v1460 = vrot.slane %v1423, 7
    %v1461 = vsel %vm118, %v1459, %v1460
    %v1462 = vrot.slane %v1460, 2
    %v1463 = vrot.slane %v1424, 7
    %v1464 = vsel %vm118, %v1462, %v1463
    %v1465 = vrot.slane %v1431, 7
    %v1466 = vrot.slane %v1465, 2
    %v1467 = vrot.slane %v1432, 7
    %v1468 = vsel %vm118, %v1466, %v1467
    %v1469 = vrot.slane %v1467, 2
    %v1470 = vrot.slane %v1439, 7
    %v1471 = vsel %vm118, %v1469, %v1470
    %v1472 = vrot.slane %v1470, 2
    %v1473 = vrot.slane %v1440, 7
    %v1474 = vsel %vm118, %v1472, %v1473
    %v1475 = vrot.slane %v1473, 2
    %v1476 = vrot.slane %v1447, 7
    %v1477 = vsel %vm118, %v1475, %v1476
    %v1478 = vrot.slane %v1476, 2
    %v1479 = vrot.slane %v1448, 7
    %v1480 = vsel %vm118, %v1478, %v1479
    %v1481 = vcombine.low %v1452, %v1455
    %v1482 = vcombine.low %v1458, %v1461
    %v1484 = vunpack.c.l.s4 1983009808
    %v1485 = vunpack.c.0.s8 %v1484
    %v1486 = vlaneseq
    %v1487 = vshrl.u32 %v1486, 7
    %v1488 = vsub.s32 %v1485, %v1487
    %v1489 = vrot.slane %v1481, %v1488
    %v1491 = vunpack.c.l.s4 1983009808
    %v1492 = vunpack.c.0.s8 %v1491
    %v1493 = vlaneseq
    %v1494 = vshrl.u32 %v1493, 7
    %v1495 = vsub.s32 %v1492, %v1494
    %v1496 = vrot.slane %v1482, %v1495
    %v1497 = vcombine.low %v1489, %v1496
    %v1498 = vcombine.low %v1464, %v1468
    %v1499 = vcombine.low %v1471, %v1474
    %v1501 = vunpack.c.l.s4 1983009808
    %v1502 = vunpack.c.0.s8 %v1501
    %v1503 = vlaneseq
    %v1504 = vshrl.u32 %v1503, 7
    %v1505 = vsub.s32 %v1502, %v1504
    %v1506 = vrot.slane %v1498, %v1505
    %v1508 = vunpack.c.l.s4 1983009808
    %v1509 = vunpack.c.0.s8 %v1508
    %v1510 = vlaneseq
    %v1511 = vshrl.u32 %v1510, 7
    %v1512 = vsub.s32 %v1509, %v1511
    %v1513 = vrot.slane %v1499, %v1512
    %v1514 = vcombine.low %v1506, %v1513
    %v1515 = vcombine.low %v1477, %v1480
    %v1517 = vunpack.c.l.s4 1983009808
    %v1518 = vunpack.c.0.s8 %v1517
    %v1519 = vlaneseq
    %v1520 = vshrl.u32 %v1519, 7
    %v1521 = vsub.s32 %v1518, %v1520
    %v1522 = vrot.slane %v1515, %v1521
    %vm1523 = vcmask 523264
    %v1524 = vsel %vm1523, %v1497, 0
    %v1526 = vsel %vm1523, %v1514, 0
    %v1528 = vsel %vm1523, %v1522, 0
    %1530 = vmatprep.subr.mxu0 0.0
    %1531 = vmatpush1.msra.mxu0 0.0
    %1532 = vmatprep.subr.mxu0 0.0
    %1533 = vmatpush1.msra.mxu0 0.0
    %1534 = vmatprep.subr.mxu0 0.0
    %1535 = vmatpush1.msra.mxu0 0.0
    %1536 = vmatprep.subr.mxu0 0.0
    %1537 = vmatpush1.msra.mxu0 0.0
    %1538 = vmatprep.subr.mxu0 0.0
    %1539 = vmatpush1.msra.mxu0 0.0
    %1540 = vmatprep.subr.mxu0 0.0
    %1541 = vmatpush1.msra.mxu0 0.0
    %1542 = vmatprep.subr.mxu0 0.0
    %1543 = vmatpush1.msra.mxu0 0.0
    %1544 = vmatprep.subr.mxu0 0.0
    %1545 = vmatpush1.msra.mxu0 0.0
    %1546 = vmatprep.subr.mxu0 0.0
    %1547 = vmatpush1.msra.mxu0 %v1394
    %1548 = vmatprep.subr.mxu0 0.0
    %1549 = vmatpush1.msra.mxu0 %v1393
    %1550 = vmatprep.subr.mxu0 0.0
    %1551 = vmatpush1.msra.mxu0 %v1392
    %1552 = vmatprep.subr.mxu0 0.0
    %1553 = vmatpush1.msra.mxu0 %v1391
    %1554 = vmatprep.subr.mxu0 0.0
    %1555 = vmatpush1.msra.mxu0 %v1390
    %1556 = vmatprep.subr.mxu0 0.0
    %1557 = vmatpush1.msra.mxu0 %v1389
    %1558 = vmatprep.subr.mxu0 0.0
    %1559 = vmatpush1.msra.mxu0 %v1388
    %1560 = vmatprep.subr.mxu0 0.0
    %1561 = vmatpush1.msra.mxu0 %v1387
    %1562 = vmatprep.subr.mxu0 0.0
    %1563 = vmatpush2.msra.mxu0 0.0
    %1564 = vmatprep.subr.mxu0 0.0
    %1565 = vmatpush2.msra.mxu0 0.0
    %1566 = vmatprep.subr.mxu0 0.0
    %1567 = vmatpush2.msra.mxu0 0.0
    %1568 = vmatprep.subr.mxu0 0.0
    %1569 = vmatpush2.msra.mxu0 0.0
    %1570 = vmatprep.subr.mxu0 0.0
    %1571 = vmatpush2.msra.mxu0 0.0
    %1572 = vmatprep.subr.mxu0 0.0
    %1573 = vmatpush2.msra.mxu0 0.0
    %1574 = vmatprep.subr.mxu0 0.0
    %1575 = vmatpush2.msra.mxu0 0.0
    %1576 = vmatprep.subr.mxu0 0.0
    %1577 = vmatpush2.msra.mxu0 0.0
    %1578 = vmatprep.subr.mxu0 0.0
    %1579 = vmatpush2.msra.mxu0 0.0
    %1580 = vmatprep.subr.mxu0 0.0
    %1581 = vmatpush2.msra.mxu0 0.0
    %1582 = vmatprep.subr.mxu0 0.0
    %1583 = vmatpush2.msra.mxu0 0.0
    %1584 = vmatprep.subr.mxu0 0.0
    %1585 = vmatpush2.msra.mxu0 0.0
    %1586 = vmatprep.subr.mxu0 0.0
    %1587 = vmatpush2.msra.mxu0 0.0
    %1588 = vmatprep.subr.mxu0 0.0
    %1589 = vmatpush2.msra.mxu0 0.0
    %1590 = vmatprep.subr.mxu0 0.0
    %1591 = vmatpush2.msra.mxu0 0.0
    %1592 = vmatprep.subr.mxu0 0.0
    %1593 = vmatpush2.msra.mxu0 0.0
    %1594 = vmatprep.mubr.f32.mxu0 0.0
    %1595 = vmatmul.mubr.f32.gmra.mxu0 %v1524
    %v1596 = vpop.f32.mrf.mxu0
    %v1597 = vadd.f32 0.0, %v1596
    %v1598 = vpop.f32.mrf.mxu0
    %1599 = vmatprep.mubr.f32.mxu0 0.0
    %1600 = vmatmul.mubr.f32.gmra.mxu0 %v1526
    %v1601 = vpop.f32.mrf.mxu0
    %v1602 = vadd.f32 0.0, %v1601
    %v1603 = vpop.f32.mrf.mxu0
    %1604 = vmatprep.mubr.f32.mxu0 0.0
    %1605 = vmatmul.mubr.f32.gmra.mxu0 %v1528
    %v1606 = vpop.f32.mrf.mxu0
    %v1607 = vadd.f32 0.0, %v1606
    %v1608 = vpop.f32.mrf.mxu0
    %1609 = vdwg.mxu0
    %v1610 = vcombine.low %v1407, %v1408
    %v1611 = vcombine.low %v1415, %v1416
    %v1613 = vunpack.c.l.s4 1983009808
    %v1614 = vunpack.c.0.s8 %v1613
    %v1615 = vlaneseq
    %v1616 = vshrl.u32 %v1615, 7
    %v1617 = vsub.s32 %v1614, %v1616
    %v1618 = vrot.slane %v1610, %v1617
    %v1620 = vunpack.c.l.s4 1983009808
    %v1621 = vunpack.c.0.s8 %v1620
    %v1622 = vlaneseq
    %v1623 = vshrl.u32 %v1622, 7
    %v1624 = vsub.s32 %v1621, %v1623
    %v1625 = vrot.slane %v1611, %v1624
    %v1626 = vcombine.low %v1618, %v1625
    %v1627 = vcombine.low %v1423, %v1431
    %v1628 = vcombine.low %v1432, %v1439
    %v1630 = vunpack.c.l.s4 1983009808
    %v1631 = vunpack.c.0.s8 %v1630
    %v1632 = vlaneseq
    %v1633 = vshrl.u32 %v1632, 7
    %v1634 = vsub.s32 %v1631, %v1633
    %v1635 = vrot.slane %v1627, %v1634
    %v1637 = vunpack.c.l.s4 1983009808
    %v1638 = vunpack.c.0.s8 %v1637
    %v1639 = vlaneseq
    %v1640 = vshrl.u32 %v1639, 7
    %v1641 = vsub.s32 %v1638, %v1640
    %v1642 = vrot.slane %v1628, %v1641
    %v1643 = vcombine.low %v1635, %v1642
    %v1644 = vcombine.low %v1440, %v1447
    %v1646 = vunpack.c.l.s4 1983009808
    %v1647 = vunpack.c.0.s8 %v1646
    %v1648 = vlaneseq
    %v1649 = vshrl.u32 %v1648, 7
    %v1650 = vsub.s32 %v1647, %v1649
    %v1651 = vrot.slane %v1644, %v1650
    %v1652 = vsel %vm1523, %v1626, 0
    %v1654 = vsel %vm1523, %v1643, 0
    %v1656 = vsel %vm1523, %v1651, 0
    %1658 = vmatprep.subr.mxu0 0.0
    %1659 = vmatpush1.msra.mxu0 0.0
    %1660 = vmatprep.subr.mxu0 0.0
    %1661 = vmatpush1.msra.mxu0 0.0
    %1662 = vmatprep.subr.mxu0 0.0
    %1663 = vmatpush1.msra.mxu0 0.0
    %1664 = vmatprep.subr.mxu0 0.0
    %1665 = vmatpush1.msra.mxu0 0.0
    %1666 = vmatprep.subr.mxu0 0.0
    %1667 = vmatpush1.msra.mxu0 0.0
    %1668 = vmatprep.subr.mxu0 0.0
    %1669 = vmatpush1.msra.mxu0 0.0
    %1670 = vmatprep.subr.mxu0 0.0
    %1671 = vmatpush1.msra.mxu0 0.0
    %1672 = vmatprep.subr.mxu0 0.0
    %1673 = vmatpush1.msra.mxu0 0.0
    %1674 = vmatprep.subr.mxu0 0.0
    %1675 = vmatpush1.msra.mxu0 %v1385
    %1676 = vmatprep.subr.mxu0 0.0
    %1677 = vmatpush1.msra.mxu0 %v1384
    %1678 = vmatprep.subr.mxu0 0.0
    %1679 = vmatpush1.msra.mxu0 %v1383
    %1680 = vmatprep.subr.mxu0 0.0
    %1681 = vmatpush1.msra.mxu0 %v1382
    %1682 = vmatprep.subr.mxu0 0.0
    %1683 = vmatpush1.msra.mxu0 %v1381
    %1684 = vmatprep.subr.mxu0 0.0
    %1685 = vmatpush1.msra.mxu0 %v1380
    %1686 = vmatprep.subr.mxu0 0.0
    %1687 = vmatpush1.msra.mxu0 %v1379
    %1688 = vmatprep.subr.mxu0 0.0
    %1689 = vmatpush1.msra.mxu0 %v1378
    %1690 = vmatprep.subr.mxu0 0.0
    %1691 = vmatpush2.msra.mxu0 0.0
    %1692 = vmatprep.subr.mxu0 0.0
    %1693 = vmatpush2.msra.mxu0 0.0
    %1694 = vmatprep.subr.mxu0 0.0
    %1695 = vmatpush2.msra.mxu0 0.0
    %1696 = vmatprep.subr.mxu0 0.0
    %1697 = vmatpush2.msra.mxu0 0.0
    %1698 = vmatprep.subr.mxu0 0.0
    %1699 = vmatpush2.msra.mxu0 0.0
    %1700 = vmatprep.subr.mxu0 0.0
    %1701 = vmatpush2.msra.mxu0 0.0
    %1702 = vmatprep.subr.mxu0 0.0
    %1703 = vmatpush2.msra.mxu0 0.0
    %1704 = vmatprep.subr.mxu0 0.0
    %1705 = vmatpush2.msra.mxu0 0.0
    %1706 = vmatprep.subr.mxu0 0.0
    %1707 = vmatpush2.msra.mxu0 0.0
    %1708 = vmatprep.subr.mxu0 0.0
    %1709 = vmatpush2.msra.mxu0 0.0
    %1710 = vmatprep.subr.mxu0 0.0
    %1711 = vmatpush2.msra.mxu0 0.0
    %1712 = vmatprep.subr.mxu0 0.0
    %1713 = vmatpush2.msra.mxu0 0.0
    %1714 = vmatprep.subr.mxu0 0.0
    %1715 = vmatpush2.msra.mxu0 0.0
    %1716 = vmatprep.subr.mxu0 0.0
    %1717 = vmatpush2.msra.mxu0 0.0
    %1718 = vmatprep.subr.mxu0 0.0
    %1719 = vmatpush2.msra.mxu0 0.0
    %1720 = vmatprep.subr.mxu0 0.0
    %1721 = vmatpush2.msra.mxu0 0.0
    %1722 = vmatprep.mubr.f32.mxu0 0.0
    %1723 = vmatmul.mubr.f32.gmra.mxu0 %v1652
    %v1724 = vpop.f32.mrf.mxu0
    %v1725 = vadd.f32 %v1597, %v1724
    %v1726 = vpop.f32.mrf.mxu0
    %1727 = vmatprep.mubr.f32.mxu0 0.0
    %1728 = vmatmul.mubr.f32.gmra.mxu0 %v1654
    %v1729 = vpop.f32.mrf.mxu0
    %v1730 = vadd.f32 %v1602, %v1729
    %v1731 = vpop.f32.mrf.mxu0
    %1732 = vmatprep.mubr.f32.mxu0 0.0
    %1733 = vmatmul.mubr.f32.gmra.mxu0 %v1656
    %v1734 = vpop.f32.mrf.mxu0
    %v1735 = vadd.f32 %v1607, %v1734
    %v1736 = vpop.f32.mrf.mxu0
    %1737 = vdwg.mxu0
    %v1741 = vcombine.high %v1725, %v1725
    %v1743 = vunpack.c.l.s4 1983009808
    %v1744 = vunpack.c.0.s8 %v1743
    %v1745 = vlaneseq
    %v1746 = vshrl.u32 %v1745, 7
    %v1747 = vsub.s32 %v1744, %v1746
    %v1748 = vrot.slane %v1725, %v1747
    %v1750 = vunpack.c.l.s4 1983009808
    %v1751 = vunpack.c.0.s8 %v1750
    %v1752 = vlaneseq
    %v1753 = vshrl.u32 %v1752, 7
    %v1754 = vsub.s32 %v1751, %v1753
    %v1755 = vrot.slane %v1741, %v1754
    %v1756 = vcombine.high %v1748, %v1748
    %v1757 = vcombine.high %v1755, %v1755
    %v1758 = vcombine.high %v1730, %v1730
    %v1760 = vunpack.c.l.s4 1983009808
    %v1761 = vunpack.c.0.s8 %v1760
    %v1762 = vlaneseq
    %v1763 = vshrl.u32 %v1762, 7
    %v1764 = vsub.s32 %v1761, %v1763
    %v1765 = vrot.slane %v1730, %v1764
    %v1767 = vunpack.c.l.s4 1983009808
    %v1768 = vunpack.c.0.s8 %v1767
    %v1769 = vlaneseq
    %v1770 = vshrl.u32 %v1769, 7
    %v1771 = vsub.s32 %v1768, %v1770
    %v1772 = vrot.slane %v1758, %v1771
    %v1773 = vcombine.high %v1765, %v1765
    %v1774 = vcombine.high %v1772, %v1772
    %v1776 = vunpack.c.l.s4 1983009808
    %v1777 = vunpack.c.0.s8 %v1776
    %v1778 = vlaneseq
    %v1779 = vshrl.u32 %v1778, 7
    %v1780 = vsub.s32 %v1777, %v1779
    %v1781 = vrot.slane %v1735, %v1780
    %v1782 = vcombine.high %v1781, %v1781
    %s1793 = scalar_lea.vmem %s5, 128
    %v1794 = vld [vmem:[%s1793] sm:$0xff]
    %v1795 = vld [vmem:[%s1793 + $0x8] sm:$0xff]
    %v1796 = vld [vmem:[%s1793 + $0x10] sm:$0xff]
    %v1797 = vld [vmem:[%s1793 + $0x18] sm:$0xff]
    %v1798 = vld [vmem:[%s1793 + $0x20] sm:$0xff]
    %v1799 = vld [vmem:[%s1793 + $0x28] sm:$0xff]
    %v1800 = vld [vmem:[%s1793 + $0x30] sm:$0xff]
    %v1801 = vld [vmem:[%s1793 + $0x38] sm:$0xff]
    %v1802 = vcombine.low %v1408, %v1415
    %v1803 = vcombine.low %v1416, %v1423
    %v1805 = vunpack.c.l.s4 1983009808
    %v1806 = vunpack.c.0.s8 %v1805
    %v1807 = vlaneseq
    %v1808 = vshrl.u32 %v1807, 7
    %v1809 = vsub.s32 %v1806, %v1808
    %v1810 = vrot.slane %v1802, %v1809
    %v1812 = vunpack.c.l.s4 1983009808
    %v1813 = vunpack.c.0.s8 %v1812
    %v1814 = vlaneseq
    %v1815 = vshrl.u32 %v1814, 7
    %v1816 = vsub.s32 %v1813, %v1815
    %v1817 = vrot.slane %v1803, %v1816
    %v1818 = vcombine.low %v1810, %v1817
    %v1819 = vcombine.low %v1424, %v1432
    %v1820 = vcombine.low %v1439, %v1440
    %v1822 = vunpack.c.l.s4 1983009808
    %v1823 = vunpack.c.0.s8 %v1822
    %v1824 = vlaneseq
    %v1825 = vshrl.u32 %v1824, 7
    %v1826 = vsub.s32 %v1823, %v1825
    %v1827 = vrot.slane %v1819, %v1826
    %v1829 = vunpack.c.l.s4 1983009808
    %v1830 = vunpack.c.0.s8 %v1829
    %v1831 = vlaneseq
    %v1832 = vshrl.u32 %v1831, 7
    %v1833 = vsub.s32 %v1830, %v1832
    %v1834 = vrot.slane %v1820, %v1833
    %v1835 = vcombine.low %v1827, %v1834
    %v1836 = vcombine.low %v1447, %v1448
    %v1838 = vunpack.c.l.s4 1983009808
    %v1839 = vunpack.c.0.s8 %v1838
    %v1840 = vlaneseq
    %v1841 = vshrl.u32 %v1840, 7
    %v1842 = vsub.s32 %v1839, %v1841
    %v1843 = vrot.slane %v1836, %v1842
    %v1844 = vsel %vm1523, %v1818, 0
    %v1846 = vsel %vm1523, %v1835, 0
    %v1848 = vsel %vm1523, %v1843, 0
    %1850 = vmatprep.subr.mxu0 0.0
    %1851 = vmatpush1.msra.mxu0 0.0
    %1852 = vmatprep.subr.mxu0 0.0
    %1853 = vmatpush1.msra.mxu0 0.0
    %1854 = vmatprep.subr.mxu0 0.0
    %1855 = vmatpush1.msra.mxu0 0.0
    %1856 = vmatprep.subr.mxu0 0.0
    %1857 = vmatpush1.msra.mxu0 0.0
    %1858 = vmatprep.subr.mxu0 0.0
    %1859 = vmatpush1.msra.mxu0 0.0
    %1860 = vmatprep.subr.mxu0 0.0
    %1861 = vmatpush1.msra.mxu0 0.0
    %1862 = vmatprep.subr.mxu0 0.0
    %1863 = vmatpush1.msra.mxu0 0.0
    %1864 = vmatprep.subr.mxu0 0.0
    %1865 = vmatpush1.msra.mxu0 0.0
    %1866 = vmatprep.subr.mxu0 0.0
    %1867 = vmatpush1.msra.mxu0 %v1801
    %1868 = vmatprep.subr.mxu0 0.0
    %1869 = vmatpush1.msra.mxu0 %v1800
    %1870 = vmatprep.subr.mxu0 0.0
    %1871 = vmatpush1.msra.mxu0 %v1799
    %1872 = vmatprep.subr.mxu0 0.0
    %1873 = vmatpush1.msra.mxu0 %v1798
    %1874 = vmatprep.subr.mxu0 0.0
    %1875 = vmatpush1.msra.mxu0 %v1797
    %1876 = vmatprep.subr.mxu0 0.0
    %1877 = vmatpush1.msra.mxu0 %v1796
    %1878 = vmatprep.subr.mxu0 0.0
    %1879 = vmatpush1.msra.mxu0 %v1795
    %1880 = vmatprep.subr.mxu0 0.0
    %1881 = vmatpush1.msra.mxu0 %v1794
    %1882 = vmatprep.subr.mxu0 0.0
    %1883 = vmatpush2.msra.mxu0 0.0
    %1884 = vmatprep.subr.mxu0 0.0
    %1885 = vmatpush2.msra.mxu0 0.0
    %1886 = vmatprep.subr.mxu0 0.0
    %1887 = vmatpush2.msra.mxu0 0.0
    %1888 = vmatprep.subr.mxu0 0.0
    %1889 = vmatpush2.msra.mxu0 0.0
    %1890 = vmatprep.subr.mxu0 0.0
    %1891 = vmatpush2.msra.mxu0 0.0
    %1892 = vmatprep.subr.mxu0 0.0
    %1893 = vmatpush2.msra.mxu0 0.0
    %1894 = vmatprep.subr.mxu0 0.0
    %1895 = vmatpush2.msra.mxu0 0.0
    %1896 = vmatprep.subr.mxu0 0.0
    %1897 = vmatpush2.msra.mxu0 0.0
    %1898 = vmatprep.subr.mxu0 0.0
    %1899 = vmatpush2.msra.mxu0 0.0
    %1900 = vmatprep.subr.mxu0 0.0
    %1901 = vmatpush2.msra.mxu0 0.0
    %1902 = vmatprep.subr.mxu0 0.0
    %1903 = vmatpush2.msra.mxu0 0.0
    %1904 = vmatprep.subr.mxu0 0.0
    %1905 = vmatpush2.msra.mxu0 0.0
    %1906 = vmatprep.subr.mxu0 0.0
    %1907 = vmatpush2.msra.mxu0 0.0
    %1908 = vmatprep.subr.mxu0 0.0
    %1909 = vmatpush2.msra.mxu0 0.0
    %1910 = vmatprep.subr.mxu0 0.0
    %1911 = vmatpush2.msra.mxu0 0.0
    %1912 = vmatprep.subr.mxu0 0.0
    %1913 = vmatpush2.msra.mxu0 0.0
    %1914 = vmatprep.mubr.f32.mxu0 0.0
    %1915 = vmatmul.mubr.f32.gmra.mxu0 %v1844
    %v1916 = vpop.f32.mrf.mxu0
    %v1917 = vadd.f32 0.0, %v1916
    %v1918 = vpop.f32.mrf.mxu0
    %1919 = vmatprep.mubr.f32.mxu0 0.0
    %1920 = vmatmul.mubr.f32.gmra.mxu0 %v1846
    %v1921 = vpop.f32.mrf.mxu0
    %v1922 = vadd.f32 0.0, %v1921
    %v1923 = vpop.f32.mrf.mxu0
    %1924 = vmatprep.mubr.f32.mxu0 0.0
    %1925 = vmatmul.mubr.f32.gmra.mxu0 %v1848
    %v1926 = vpop.f32.mrf.mxu0
    %v1927 = vadd.f32 0.0, %v1926
    %v1928 = vpop.f32.mrf.mxu0
    %1929 = vdwg.mxu0
    %v1933 = vcombine.high %v1917, %v1917
    %v1935 = vunpack.c.l.s4 1983009808
    %v1936 = vunpack.c.0.s8 %v1935
    %v1937 = vlaneseq
    %v1938 = vshrl.u32 %v1937, 7
    %v1939 = vsub.s32 %v1936, %v1938
    %v1940 = vrot.slane %v1917, %v1939
    %v1942 = vunpack.c.l.s4 1983009808
    %v1943 = vunpack.c.0.s8 %v1942
    %v1944 = vlaneseq
    %v1945 = vshrl.u32 %v1944, 7
    %v1946 = vsub.s32 %v1943, %v1945
    %v1947 = vrot.slane %v1933, %v1946
    %v1948 = vcombine.high %v1940, %v1940
    %v1949 = vcombine.high %v1947, %v1947
    %v1950 = vcombine.high %v1922, %v1922
    %v1952 = vunpack.c.l.s4 1983009808
    %v1953 = vunpack.c.0.s8 %v1952
    %v1954 = vlaneseq
    %v1955 = vshrl.u32 %v1954, 7
    %v1956 = vsub.s32 %v1953, %v1955
    %v1957 = vrot.slane %v1922, %v1956
    %v1959 = vunpack.c.l.s4 1983009808
    %v1960 = vunpack.c.0.s8 %v1959
    %v1961 = vlaneseq
    %v1962 = vshrl.u32 %v1961, 7
    %v1963 = vsub.s32 %v1960, %v1962
    %v1964 = vrot.slane %v1950, %v1963
    %v1965 = vcombine.high %v1957, %v1957
    %v1966 = vcombine.high %v1964, %v1964
    %v1968 = vunpack.c.l.s4 1983009808
    %v1969 = vunpack.c.0.s8 %v1968
    %v1970 = vlaneseq
    %v1971 = vshrl.u32 %v1970, 7
    %v1972 = vsub.s32 %v1969, %v1971
    %v1973 = vrot.slane %v1927, %v1972
    %v1974 = vcombine.high %v1973, %v1973
    %v1985 = vadd.f32 %v1748, %v1940
    %v1986 = vadd.f32 %v1756, %v1948
    %v1987 = vadd.f32 %v1755, %v1947
    %v1988 = vadd.f32 %v1757, %v1949
    %v1989 = vadd.f32 %v1765, %v1957
    %v1990 = vadd.f32 %v1773, %v1965
    %v1991 = vadd.f32 %v1772, %v1964
    %v1992 = vadd.f32 %v1774, %v1966
    %v1993 = vadd.f32 %v1781, %v1973
    %v1994 = vadd.f32 %v1782, %v1974
    %v1995 = vld [vmem:[%s6] sm:$0x1]
    %v1997 = vlaneseq
    %v1998 = vshrl.u32 %v1997, 7
    %v1999 = vsub.s32 0, %v1998
    %v2000 = vrot.slane %v1995, %v1999
    %v2001 = vcombine.high %v2000, %v2000
    %v2003 = vunpack.c.l.s4 1983009808
    %v2004 = vunpack.c.0.s8 %v2003
    %v2005 = vlaneseq
    %v2006 = vshrl.u32 %v2005, 7
    %v2007 = vsub.s32 %v2004, %v2006
    %v2008 = vrot.slane %v2000, %v2007
    %v2010 = vunpack.c.l.s4 1983009808
    %v2011 = vunpack.c.0.s8 %v2010
    %v2012 = vlaneseq
    %v2013 = vshrl.u32 %v2012, 7
    %v2014 = vsub.s32 %v2011, %v2013
    %v2015 = vrot.slane %v2001, %v2014
    %v2016 = vcombine.high %v2008, %v2008
    %v2017 = vcombine.high %v2015, %v2015
    %v2022 = vadd.f32 %v1985, %v2008
    %v2023 = vadd.f32 %v1986, %v2016
    %v2024 = vadd.f32 %v1987, %v2015
    %v2025 = vadd.f32 %v1988, %v2017
    %v2026 = vadd.f32 %v1989, %v2008
    %v2027 = vadd.f32 %v1990, %v2008
    %v2028 = vadd.f32 %v1991, %v2016
    %v2029 = vadd.f32 %v1992, %v2015
    %v2030 = vadd.f32 %v1993, %v2017
    %v2031 = vadd.f32 %v1994, %v2008
    %v2032 = vmax.f32 %v2022, 0.0
    %v2033 = vmax.f32 %v2023, 0.0
    %v2034 = vmax.f32 %v2024, 0.0
    %v2035 = vmax.f32 %v2025, 0.0
    %v2036 = vmax.f32 %v2026, 0.0
    %v2037 = vmax.f32 %v2027, 0.0
    %v2038 = vmax.f32 %v2028, 0.0
    %v2039 = vmax.f32 %v2029, 0.0
    %v2040 = vmax.f32 %v2030, 0.0
    %v2041 = vmax.f32 %v2031, 0.0
    %v2052 = vcombine.low %v2032, %v2033
    %v2053 = vcombine.low %v2034, %v2035
    %v2055 = vunpack.c.l.s4 1983009808
    %v2056 = vunpack.c.0.s8 %v2055
    %v2057 = vlaneseq
    %v2058 = vshrl.u32 %v2057, 7
    %v2059 = vsub.s32 %v2056, %v2058
    %v2060 = vrot.slane %v2052, %v2059
    %v2062 = vunpack.c.l.s4 1983009808
    %v2063 = vunpack.c.0.s8 %v2062
    %v2064 = vlaneseq
    %v2065 = vshrl.u32 %v2064, 7
    %v2066 = vsub.s32 %v2063, %v2065
    %v2067 = vrot.slane %v2053, %v2066
    %v2068 = vcombine.low %v2060, %v2067
    %v2070 = vunpack.c.l.s4 1983009808
    %v2071 = vunpack.c.0.s8 %v2070
    %v2072 = vlaneseq
    %v2073 = vshrl.u32 %v2072, 7
    %v2074 = vsub.s32 %v2071, %v2073
    %v2075 = vrot.slane %v2036, %v2074
    %v2076 = vcombine.low %v2037, %v2038
    %v2077 = vcombine.low %v2039, %v2040
    %v2079 = vunpack.c.l.s4 1983009808
    %v2080 = vunpack.c.0.s8 %v2079
    %v2081 = vlaneseq
    %v2082 = vshrl.u32 %v2081, 7
    %v2083 = vsub.s32 %v2080, %v2082
    %v2084 = vrot.slane %v2076, %v2083
    %v2086 = vunpack.c.l.s4 1983009808
    %v2087 = vunpack.c.0.s8 %v2086
    %v2088 = vlaneseq
    %v2089 = vshrl.u32 %v2088, 7
    %v2090 = vsub.s32 %v2087, %v2089
    %v2091 = vrot.slane %v2077, %v2090
    %v2092 = vcombine.low %v2084, %v2091
    %v2094 = vunpack.c.l.s4 1983009808
    %v2095 = vunpack.c.0.s8 %v2094
    %v2096 = vlaneseq
    %v2097 = vshrl.u32 %v2096, 7
    %v2098 = vsub.s32 %v2095, %v2097
    %v2099 = vrot.slane %v2041, %v2098
    %v2104 = vsel %vm967, %v2068, 0.0
    %vm2105 = vcmask 254976
    %v2106 = vsel %vm2105, %v2075, 0.0
    %v2107 = vadd.f32 %v2104, %v2106
    %v2108 = vrot.slane %v2107, 4
    %v2109 = vadd.f32 %v2107, %v2108
    %v2110 = vrot.slane %v2109, 2
    %v2111 = vadd.f32 %v2109, %v2110
    %v2112 = vrot.slane %v2111, 1
    %v2113 = vadd.f32 %v2111, %v2112
    %v2114 = vsel %vm967, %v2092, 0.0
    %v2115 = vsel %vm2105, %v2099, 0.0
    %v2116 = vadd.f32 %v2114, %v2115
    %v2117 = vrot.slane %v2116, 4
    %v2118 = vadd.f32 %v2116, %v2117
    %v2119 = vrot.slane %v2118, 2
    %v2120 = vadd.f32 %v2118, %v2119
    %v2121 = vrot.slane %v2120, 1
    %v2122 = vadd.f32 %v2120, %v2121
    %v2123 = vmul.f32 %v2113, 0.1
    %v2124 = vmul.f32 %v2122, 0.1
    %v2125 = vld [vmem:[%s7] sm:$0xff]
    %v2126 = vld [vmem:[%s7 + $0x8] sm:$0xff]
    %v2127 = vld [vmem:[%s7 + $0x10] sm:$0xff]
    %v2128 = vld [vmem:[%s7 + $0x18] sm:$0xff]
    %v2129 = vld [vmem:[%s8] sm:$0x1]
    %v2131 = vlaneseq
    %v2132 = vshrl.u32 %v2131, 7
    %v2133 = vsub.s32 0, %v2132
    %v2134 = vrot.slane %v2129, %v2133
    %vm2138 = vcmask 1041409
    %v2139 = vsel %vm2138, %v2124, %v2123
    %v2140 = vsel %vm967, %v2139, 0
    %2142 = vmatprep.subr.mxu0 0.0
    %2143 = vmatpush1.msra.mxu0 0.0
    %2144 = vmatprep.subr.mxu0 0.0
    %2145 = vmatpush1.msra.mxu0 0.0
    %2146 = vmatprep.subr.mxu0 0.0
    %2147 = vmatpush1.msra.mxu0 0.0
    %2148 = vmatprep.subr.mxu0 0.0
    %2149 = vmatpush1.msra.mxu0 0.0
    %2150 = vmatprep.subr.mxu0 0.0
    %2151 = vmatpush1.msra.mxu0 0.0
    %2152 = vmatprep.subr.mxu0 0.0
    %2153 = vmatpush1.msra.mxu0 0.0
    %2154 = vmatprep.subr.mxu0 0.0
    %2155 = vmatpush1.msra.mxu0 0.0
    %2156 = vmatprep.subr.mxu0 0.0
    %2157 = vmatpush1.msra.mxu0 0.0
    %2158 = vmatprep.subr.mxu0 0.0
    %2159 = vmatpush1.msra.mxu0 0.0
    %2160 = vmatprep.subr.mxu0 0.0
    %2161 = vmatpush1.msra.mxu0 0.0
    %2162 = vmatprep.subr.mxu0 0.0
    %2163 = vmatpush1.msra.mxu0 0.0
    %2164 = vmatprep.subr.mxu0 0.0
    %2165 = vmatpush1.msra.mxu0 0.0
    %2166 = vmatprep.subr.mxu0 0.0
    %2167 = vmatpush1.msra.mxu0 %v2128
    %2168 = vmatprep.subr.mxu0 0.0
    %2169 = vmatpush1.msra.mxu0 %v2127
    %2170 = vmatprep.subr.mxu0 0.0
    %2171 = vmatpush1.msra.mxu0 %v2126
    %2172 = vmatprep.subr.mxu0 0.0
    %2173 = vmatpush1.msra.mxu0 %v2125
    %2174 = vmatprep.subr.mxu0 0.0
    %2175 = vmatpush2.msra.mxu0 0.0
    %2176 = vmatprep.subr.mxu0 0.0
    %2177 = vmatpush2.msra.mxu0 0.0
    %2178 = vmatprep.subr.mxu0 0.0
    %2179 = vmatpush2.msra.mxu0 0.0
    %2180 = vmatprep.subr.mxu0 0.0
    %2181 = vmatpush2.msra.mxu0 0.0
    %2182 = vmatprep.subr.mxu0 0.0
    %2183 = vmatpush2.msra.mxu0 0.0
    %2184 = vmatprep.subr.mxu0 0.0
    %2185 = vmatpush2.msra.mxu0 0.0
    %2186 = vmatprep.subr.mxu0 0.0
    %2187 = vmatpush2.msra.mxu0 0.0
    %2188 = vmatprep.subr.mxu0 0.0
    %2189 = vmatpush2.msra.mxu0 0.0
    %2190 = vmatprep.subr.mxu0 0.0
    %2191 = vmatpush2.msra.mxu0 0.0
    %2192 = vmatprep.subr.mxu0 0.0
    %2193 = vmatpush2.msra.mxu0 0.0
    %2194 = vmatprep.subr.mxu0 0.0
    %2195 = vmatpush2.msra.mxu0 0.0
    %2196 = vmatprep.subr.mxu0 0.0
    %2197 = vmatpush2.msra.mxu0 0.0
    %2198 = vmatprep.subr.mxu0 0.0
    %2199 = vmatpush2.msra.mxu0 0.0
    %2200 = vmatprep.subr.mxu0 0.0
    %2201 = vmatpush2.msra.mxu0 0.0
    %2202 = vmatprep.subr.mxu0 0.0
    %2203 = vmatpush2.msra.mxu0 0.0
    %2204 = vmatprep.subr.mxu0 0.0
    %2205 = vmatpush2.msra.mxu0 0.0
    %2206 = vmatprep.mubr.f32.mxu0 0.0
    %2207 = vmatmul.mubr.f32.gmra.mxu0 %v2140
    %v2208 = vpop.f32.mrf.mxu0
    %v2209 = vadd.f32 %v2134, %v2208
    %v2210 = vpop.f32.mrf.mxu0
    %2211 = vdwg.mxu0
    %2212 = vst [vmem:[#allocation2] sm:$0x3] %v2209
    // Predicated region
    $region38: #{tpu_custom_call.1} parent=1 // pred_check
      _
    $region39: #{tpu_custom_call.1} parent=1 // pred_check_branch
      %2214 = sbr.rel (0) target = $region41
    $region40: #{tpu_custom_call.1} parent=1 // pred_region
      %s2216 = ssub.s32 32, 32
      %2217 = vsyncadd [#allocation3], %s2216
      %s2219 = sshll.u32 [#allocation2], 4
      %s2220 = int_to_ptr.vmem [resolvable:$true] %s2219
      %2222 = dma.vmem_to_hbm [thread:$0]  %s2220, 32, %s9, [#allocation3]
    $region41: #{tpu_custom_call.1} parent=1 // pred_fallthru
      _
    // Predicated region
    $region42: #{tpu_custom_call.1} parent=1 // pred_check
      _
    $region43: #{tpu_custom_call.1} parent=1 // pred_check_branch
      %2224 = sbr.rel (0) target = $region45
    $region44: #{tpu_custom_call.1} parent=1 // pred_region
      %2225 = dma.done [#allocation3], 32
    $region45: #{tpu_custom_call.1} parent=1 // pred_fallthru
      _
    %2226 = vsyncpa [#allocation3], 1

</llo_original>
